<compile_context>
chip_gen: v7x
topology: tpu7x:2x2x1
jax: 0.10.0
libtpu: 0.0.40
codegen_flags: <defaults>
</compile_context>

<pallas_src>
import functools

import jax
import jax.numpy as jnp
from jax import lax
from jax.experimental import pallas as pl
from jax.experimental.pallas import tpu as pltpu


def _inter_proj_kernel(
    dense_ref,    # (BT, D)        input dtype (f32)
    sparse_ref,   # (BT, F*D)      input dtype (f32)
    wad_ref,      # (D, H1+H2)     compute dtype   (rows [:D] of fused W_a)
    was_ref,      # (F*D, H1+H2)   compute dtype   (rows [D:] of fused W_a)
    ba_ref,       # (1, H1+H2)     f32
    w1b_ref,      # (H1, F1*D)     compute dtype
    b1b_ref,      # (1, F1*D)      f32
    w2b_ref,      # (H2, F2*D)     compute dtype, columns permuted to (F2, D) layout
    b2b_ref,      # (1, F2*D)      f32, columns permuted to (F2, D) layout
    out_ref,      # (BT, F1*F2)    f32
    *, D, F1, F2, H1,
):
    cdt = wad_ref.dtype  # MXU compute dtype (bf16 by default, f32 for testing)

    dense = dense_ref[...].astype(cdt)
    sparse = sparse_ref[...].astype(cdt)

    # Fused first layer of both interaction MLPs. `combined` never exists:
    #   combined @ W_a == dense @ W_a[:D] + sparse_flat @ W_a[D:]
    h = (
        jnp.dot(dense, wad_ref[...], preferred_element_type=jnp.float32)
        + jnp.dot(sparse, was_ref[...], preferred_element_type=jnp.float32)
        + ba_ref[...]
    )
    h = jnp.maximum(h, 0.0)                       # ReLU on the f32 accumulator

    h1 = h[:, :H1].astype(cdt)                    # branch-1 hidden
    h2 = h[:, H1:].astype(cdt)                    # branch-2 hidden

    # Branch-1 second layer -> (BT, F1*D)
    y = jnp.dot(h1, w1b_ref[...], preferred_element_type=jnp.float32) + b1b_ref[...]
    y = jnp.maximum(y, 0.0)
    # Branch-2 second layer -> (BT, F2*D), already laid out as (F2, D) per row
    z = jnp.dot(h2, w2b_ref[...], preferred_element_type=jnp.float32) + b2b_ref[...]
    z = jnp.maximum(z, 0.0)

    bt = y.shape[0]
    y3 = y.reshape(bt, F1, D).astype(cdt)         # (BT, F1, D), D on lanes
    z3 = z.reshape(bt, F2, D).astype(cdt)         # (BT, F2, D), D on lanes

    # torch.bmm(y.view(B,F1,D), z.view(B,D,F2)) == einsum('bfd,bgd->bfg', y3, z3)
    inter = lax.dot_general(
        y3, z3,
        dimension_numbers=(((2,), (2,)), ((0,), (0,))),
        preferred_element_type=jnp.float32,
    )  # (BT, F1, F2)

    out_ref[...] = inter.reshape(bt, F1 * F2).astype(out_ref.dtype)


def interaction_projection_arch(
    dense, sparse, params, *, F1, F2,
    batch_tile=256,                  # multiple of 128 recommended; sweep up to VMEM limit
    compute_dtype=jnp.bfloat16,      # MXU operand dtype; accumulation stays f32
    vmem_limit_bytes=None,           # set explicitly on v7x (64 MiB physical VMEM)
):
    """Pallas implementation of InteractionProjectionArch.forward.

    dense:  (B, D) float32
    sparse: (B, F, D) float32
    params: dict with w1a (Cin,H1), b1a (1,H1), w1b (H1,F1*D), b1b (1,F1*D),
                      w2a (Cin,H2), b2a (1,H2), w2b (H2,F2*D), b2b (1,F2*D)
            where Cin = (F+1)*D and weights are stored (in, out) for x @ W.
    returns (B, D + F1*F2) float32
    """
    B, D = dense.shape
    F = sparse.shape[1]
    if F <= 0:
        # Mirrors torchrec: returns dense_features directly (shape (B, D)).
        return dense

    cdt = jnp.dtype(compute_dtype)

    # ---------------- parameter preparation (tiny, done outside the kernel) ----
    w1a, b1a = params["w1a"], params["b1a"]
    w1b, b1b = params["w1b"], params["b1b"]
    w2a, b2a = params["w2a"], params["b2a"]
    w2b, b2b = params["w2b"], params["b2b"]
    H1 = w1a.shape[1]

    # Fuse the two first layers into one wide matmul: W_a = [w1a | w2a].
    wa = jnp.concatenate([w1a, w2a], axis=1)                    # (Cin, H1+H2)
    ba = jnp.concatenate([b1a, b2a], axis=1).astype(jnp.float32)
    # Split W_a rows so `combined` never needs to be materialized.
    wa_d = wa[:D, :].astype(cdt)                                # (D,   H1+H2)
    wa_s = wa[D:, :].astype(cdt)                                # (F*D, H1+H2)

    # Permute branch-2 second-layer columns: output row layout (D, F2) -> (F2, D)
    # so the interaction bmm contracts the last (lane) dim of both operands.
    perm = (jnp.arange(D)[None, :] * F2 + jnp.arange(F2)[:, None]).reshape(-1)
    w2b_p = w2b[:, perm].astype(cdt)
    b2b_p = b2b[:, perm].astype(jnp.float32)

    w1b_c = w1b.astype(cdt)
    b1b_c = b1b.astype(jnp.float32)

    # ---------------- batch tiling ---------------------------------------------
    # NOTE(v7x): pick batch_tile so B // BT >= 2, letting the "parallel" batch
    # axis shard across both TensorCores.
    BT = int(min(batch_tile, B))
    n_blocks = -(-B // BT)
    Bp = n_blocks * BT
    dense_in = dense
    sparse_flat = sparse.reshape(B, F * D)
    if Bp != B:
        pad = Bp - B
        dense_in = jnp.pad(dense_in, ((0, pad), (0, 0)))
        sparse_flat = jnp.pad(sparse_flat, ((0, pad), (0, 0)))

    kernel = functools.partial(_inter_proj_kernel, D=D, F1=F1, F2=F2, H1=H1)

    def const_spec(arr):
        # Weights / biases: same full block for every grid step (stay resident).
        # TODO(synk): on v7x consider pipeline_mode=pl.Buffered(1) for these
        # constant-index blocks to halve their VMEM footprint.
        n = arr.ndim
        return pl.BlockSpec(arr.shape, lambda i: (0,) * n)

    inter_flat = pl.pallas_call(
        kernel,
        out_shape=jax.ShapeDtypeStruct((Bp, F1 * F2), jnp.float32),
        grid=(n_blocks,),
        in_specs=[
            pl.BlockSpec((BT, D), lambda i: (i, 0)),
            pl.BlockSpec((BT, F * D), lambda i: (i, 0)),
            const_spec(wa_d), const_spec(wa_s), const_spec(ba),
            const_spec(w1b_c), const_spec(b1b_c),
            const_spec(w2b_p), const_spec(b2b_p),
        ],
        out_specs=pl.BlockSpec((BT, F1 * F2), lambda i: (i, 0)),
        compiler_params=pltpu.CompilerParams(
            dimension_semantics=("parallel",),
            vmem_limit_bytes=vmem_limit_bytes,
        ),
    )(dense_in, sparse_flat, wa_d, wa_s, ba, w1b_c, b1b_c, w2b_p, b2b_p)

    if Bp != B:
        inter_flat = inter_flat[:B]

    # Dense passthrough concat stays in plain JAX (keeps the kernel's output
    # block free of the misaligned column-D boundary).
    return jnp.concatenate([dense, inter_flat.astype(dense.dtype)], axis=1)


def _reference(dense, sparse, params, F1, F2):
    """Pure-JAX f32 reference mirroring the PyTorch forward."""
    B, D = dense.shape
    x = jnp.concatenate([dense[:, None, :], sparse], axis=1).reshape(B, -1)

    def mlp(x, wa, ba, wb, bb):
        h = jnp.maximum(x @ wa + ba, 0.0)
        return jnp.maximum(h @ wb + bb, 0.0)

    y = mlp(x, params["w1a"], params["b1a"], params["w1b"], params["b1b"])
    z = mlp(x, params["w2a"], params["b2a"], params["w2b"], params["b2b"])
    inter = jnp.einsum("bfd,bdg->bfg", y.reshape(B, F1, D), z.reshape(B, D, F2))
    return jnp.concatenate([dense, inter.reshape(B, -1)], axis=1)


if __name__ == "__main__":
    # Small DLRM-like configuration (docstring example, slightly resized).
    B = 16       # batch
    D = 8        # embedding dim
    F = 3        # num sparse features
    F1 = 4       # branch-1 output = F1 * D
    F2 = 4       # branch-2 output = F2 * D
    Cin = (F + 1) * D
    H1 = 4 * D   # hidden size of branch-1 MLP
    H2 = 4 * D   # hidden size of branch-2 MLP

    key = jax.random.PRNGKey(0)
    keys = jax.random.split(key, 6)

    dense = jax.random.normal(keys[0], (B, D), dtype=jnp.float32)
    sparse = jax.random.normal(keys[1], (B, F, D), dtype=jnp.float32)

    def init_linear(k, fan_in, fan_out):
        kw, kb = jax.random.split(k)
        w = jax.random.normal(kw, (fan_in, fan_out), dtype=jnp.float32) / jnp.sqrt(fan_in)
        b = jax.random.normal(kb, (1, fan_out), dtype=jnp.float32) * 0.01
        return w, b

    w1a, b1a = init_linear(keys[2], Cin, H1)
    w1b, b1b = init_linear(keys[3], H1, F1 * D)
    w2a, b2a = init_linear(keys[4], Cin, H2)
    w2b, b2b = init_linear(keys[5], H2, F2 * D)

    params = dict(w1a=w1a, b1a=b1a, w1b=w1b, b1b=b1b,
                  w2a=w2a, b2a=b2a, w2b=w2b, b2b=b2b)

    ref = _reference(dense, sparse, params, F1, F2)

    # 1) f32 compute path: tight semantic check of the kernel logic.
    out_f32 = interaction_projection_arch(
        dense, sparse, params, F1=F1, F2=F2,
        batch_tile=256, compute_dtype=jnp.float32)
    out_f32 = jax.block_until_ready(out_f32)
    assert out_f32.shape == (B, D + F1 * F2), out_f32.shape
    assert jnp.allclose(out_f32, ref, atol=1e-4, rtol=1e-4), "f32 path mismatch"

    # 2) bf16 compute path (production default): looser tolerance vs f32 reference.
    out_bf16 = interaction_projection_arch(
        dense, sparse, params, F1=F1, F2=F2,
        batch_tile=256, compute_dtype=jnp.bfloat16)
    out_bf16 = jax.block_until_ready(out_bf16)
    assert out_bf16.shape == (B, D + F1 * F2), out_bf16.shape
    assert jnp.allclose(out_bf16, ref, atol=3e-2, rtol=3e-2), "bf16 path mismatch"

    print("KERNEL_OK")
</pallas_src>

<mosaic_0001>
module attributes {stable_mosaic.version = 11 : i64} {
  func.func @_inter_proj_kernel(%arg0: i32, %arg1: memref<16x8xf32, #tpu.memory_space<vmem>>, %arg2: memref<16x24xf32, #tpu.memory_space<vmem>>, %arg3: memref<8x64xf32, #tpu.memory_space<vmem>>, %arg4: memref<24x64xf32, #tpu.memory_space<vmem>>, %arg5: memref<1x64xf32, #tpu.memory_space<vmem>>, %arg6: memref<32x32xf32, #tpu.memory_space<vmem>>, %arg7: memref<1x32xf32, #tpu.memory_space<vmem>>, %arg8: memref<32x32xf32, #tpu.memory_space<vmem>>, %arg9: memref<1x32xf32, #tpu.memory_space<vmem>>, %arg10: memref<16x16xf32, #tpu.memory_space<vmem>>) attributes {dimension_semantics = [#tpu.dimension_semantics<parallel>], iteration_bounds = array<i64: 1>, scalar_prefetch = 0 : i64, scratch_operands = 0 : i64, tpu.core_type = #tpu.core_type<tc>, window_params = [{transform_indices = @transform_0, window_bounds = array<i64: 16, 8>}, {transform_indices = @transform_1, window_bounds = array<i64: 16, 24>}, {pipeline_mode = #tpu.pipeline_mode<synchronous>, transform_indices = @transform_2, window_bounds = array<i64: 8, 64>}, {pipeline_mode = #tpu.pipeline_mode<synchronous>, transform_indices = @transform_3, window_bounds = array<i64: 24, 64>}, {pipeline_mode = #tpu.pipeline_mode<synchronous>, transform_indices = @transform_4, window_bounds = array<i64: 1, 64>}, {pipeline_mode = #tpu.pipeline_mode<synchronous>, transform_indices = @transform_5, window_bounds = array<i64: 32, 32>}, {pipeline_mode = #tpu.pipeline_mode<synchronous>, transform_indices = @transform_6, window_bounds = array<i64: 1, 32>}, {pipeline_mode = #tpu.pipeline_mode<synchronous>, transform_indices = @transform_7, window_bounds = array<i64: 32, 32>}, {pipeline_mode = #tpu.pipeline_mode<synchronous>, transform_indices = @transform_8, window_bounds = array<i64: 1, 32>}, {transform_indices = @transform_9, window_bounds = array<i64: 16, 16>}]} {
    %c0 = arith.constant 0 : index
    %c0_0 = arith.constant 0 : index
    %0 = vector.load %arg1[%c0, %c0_0] : memref<16x8xf32, #tpu.memory_space<vmem>>, vector<16x8xf32>
    %c0_1 = arith.constant 0 : index
    %c0_2 = arith.constant 0 : index
    %1 = vector.load %arg2[%c0_1, %c0_2] : memref<16x24xf32, #tpu.memory_space<vmem>>, vector<16x24xf32>
    %c0_3 = arith.constant 0 : index
    %c0_4 = arith.constant 0 : index
    %2 = vector.load %arg3[%c0_3, %c0_4] : memref<8x64xf32, #tpu.memory_space<vmem>>, vector<8x64xf32>
    %cst = arith.constant dense<0.000000e+00> : vector<16x64xf32>
    %3 = tpu.matmul %0, %2, %cst {dimension_numbers = #tpu.dot_dimension_numbers<[1], [0], [0], [1], [0, 0, 1, 1], [], []>} : vector<16x8xf32>, vector<8x64xf32>, vector<16x64xf32> -> vector<16x64xf32>
    %c0_5 = arith.constant 0 : index
    %c0_6 = arith.constant 0 : index
    %4 = vector.load %arg4[%c0_5, %c0_6] : memref<24x64xf32, #tpu.memory_space<vmem>>, vector<24x64xf32>
    %cst_7 = arith.constant dense<0.000000e+00> : vector<16x64xf32>
    %5 = tpu.matmul %1, %4, %cst_7 {dimension_numbers = #tpu.dot_dimension_numbers<[1], [0], [0], [1], [0, 0, 1, 1], [], []>} : vector<16x24xf32>, vector<24x64xf32>, vector<16x64xf32> -> vector<16x64xf32>
    %6 = arith.addf %3, %5 : vector<16x64xf32>
    %c0_8 = arith.constant 0 : index
    %c0_9 = arith.constant 0 : index
    %7 = vector.load %arg5[%c0_8, %c0_9] : memref<1x64xf32, #tpu.memory_space<vmem>>, vector<1x64xf32>
    %8 = vector.broadcast %7 : vector<1x64xf32> to vector<16x64xf32>
    %9 = arith.addf %6, %8 : vector<16x64xf32>
    %cst_10 = arith.constant 0.000000e+00 : f32
    %10 = vector.broadcast %cst_10 : f32 to vector<16x64xf32>
    %11 = arith.maximumf %9, %10 : vector<16x64xf32>
    %12 = vector.extract_strided_slice %11 {offsets = [0, 0], sizes = [16, 32], strides = [1, 1]} : vector<16x64xf32> to vector<16x32xf32>
    %13 = vector.extract_strided_slice %11 {offsets = [0, 32], sizes = [16, 32], strides = [1, 1]} : vector<16x64xf32> to vector<16x32xf32>
    %c0_11 = arith.constant 0 : index
    %c0_12 = arith.constant 0 : index
    %14 = vector.load %arg6[%c0_11, %c0_12] : memref<32x32xf32, #tpu.memory_space<vmem>>, vector<32x32xf32>
    %cst_13 = arith.constant dense<0.000000e+00> : vector<16x32xf32>
    %15 = tpu.matmul %12, %14, %cst_13 {dimension_numbers = #tpu.dot_dimension_numbers<[1], [0], [0], [1], [0, 0, 1, 1], [], []>} : vector<16x32xf32>, vector<32x32xf32>, vector<16x32xf32> -> vector<16x32xf32>
    %c0_14 = arith.constant 0 : index
    %c0_15 = arith.constant 0 : index
    %16 = vector.load %arg7[%c0_14, %c0_15] : memref<1x32xf32, #tpu.memory_space<vmem>>, vector<1x32xf32>
    %17 = vector.broadcast %16 : vector<1x32xf32> to vector<16x32xf32>
    %18 = arith.addf %15, %17 : vector<16x32xf32>
    %cst_16 = arith.constant 0.000000e+00 : f32
    %19 = vector.broadcast %cst_16 : f32 to vector<16x32xf32>
    %20 = arith.maximumf %18, %19 : vector<16x32xf32>
    %c0_17 = arith.constant 0 : index
    %c0_18 = arith.constant 0 : index
    %21 = vector.load %arg8[%c0_17, %c0_18] : memref<32x32xf32, #tpu.memory_space<vmem>>, vector<32x32xf32>
    %cst_19 = arith.constant dense<0.000000e+00> : vector<16x32xf32>
    %22 = tpu.matmul %13, %21, %cst_19 {dimension_numbers = #tpu.dot_dimension_numbers<[1], [0], [0], [1], [0, 0, 1, 1], [], []>} : vector<16x32xf32>, vector<32x32xf32>, vector<16x32xf32> -> vector<16x32xf32>
    %c0_20 = arith.constant 0 : index
    %c0_21 = arith.constant 0 : index
    %23 = vector.load %arg9[%c0_20, %c0_21] : memref<1x32xf32, #tpu.memory_space<vmem>>, vector<1x32xf32>
    %24 = vector.broadcast %23 : vector<1x32xf32> to vector<16x32xf32>
    %25 = arith.addf %22, %24 : vector<16x32xf32>
    %cst_22 = arith.constant 0.000000e+00 : f32
    %26 = vector.broadcast %cst_22 : f32 to vector<16x32xf32>
    %27 = arith.maximumf %25, %26 : vector<16x32xf32>
    %28 = vector.shape_cast %20 : vector<16x32xf32> to vector<16x4x8xf32>
    %29 = vector.shape_cast %27 : vector<16x32xf32> to vector<16x4x8xf32>
    %cst_23 = arith.constant dense<0.000000e+00> : vector<16x4x4xf32>
    %30 = tpu.matmul %28, %29, %cst_23 {dimension_numbers = #tpu.dot_dimension_numbers<[2], [2], [1], [1], [0, 0, 0, 1, 1, 1], [0], [0]>} : vector<16x4x8xf32>, vector<16x4x8xf32>, vector<16x4x4xf32> -> vector<16x4x4xf32>
    %31 = vector.shape_cast %30 : vector<16x4x4xf32> to vector<16x16xf32>
    %c0_24 = arith.constant 0 : index
    %c0_25 = arith.constant 0 : index
    %32 = vector.load %arg10[%c0_24, %c0_25] : memref<16x16xf32, #tpu.memory_space<vmem>>, vector<16x16xf32>
    tpu.vector_store %arg10[%c0_24, %c0_25], %31 {strides = array<i32>} : memref<16x16xf32, #tpu.memory_space<vmem>>, vector<16x16xf32>,
    return
  }
  func.func @transform_0(%arg0: i32) -> (i32, i32) {
    %c0_i32 = arith.constant 0 : i32
    %c0_i32_0 = arith.constant 0 : i32
    return %arg0, %c0_i32 : i32, i32
  }
  func.func @transform_1(%arg0: i32) -> (i32, i32) {
    %c0_i32 = arith.constant 0 : i32
    %c0_i32_0 = arith.constant 0 : i32
    return %arg0, %c0_i32 : i32, i32
  }
  func.func @transform_2(%arg0: i32) -> (i32, i32) {
    %c0_i32 = arith.constant 0 : i32
    %c0_i32_0 = arith.constant 0 : i32
    %c0_i32_1 = arith.constant 0 : i32
    return %c0_i32, %c0_i32_0 : i32, i32
  }
  func.func @transform_3(%arg0: i32) -> (i32, i32) {
    %c0_i32 = arith.constant 0 : i32
    %c0_i32_0 = arith.constant 0 : i32
    %c0_i32_1 = arith.constant 0 : i32
    return %c0_i32, %c0_i32_0 : i32, i32
  }
  func.func @transform_4(%arg0: i32) -> (i32, i32) {
    %c0_i32 = arith.constant 0 : i32
    %c0_i32_0 = arith.constant 0 : i32
    %c0_i32_1 = arith.constant 0 : i32
    return %c0_i32, %c0_i32_0 : i32, i32
  }
  func.func @transform_5(%arg0: i32) -> (i32, i32) {
    %c0_i32 = arith.constant 0 : i32
    %c0_i32_0 = arith.constant 0 : i32
    %c0_i32_1 = arith.constant 0 : i32
    return %c0_i32, %c0_i32_0 : i32, i32
  }
  func.func @transform_6(%arg0: i32) -> (i32, i32) {
    %c0_i32 = arith.constant 0 : i32
    %c0_i32_0 = arith.constant 0 : i32
    %c0_i32_1 = arith.constant 0 : i32
    return %c0_i32, %c0_i32_0 : i32, i32
  }
  func.func @transform_7(%arg0: i32) -> (i32, i32) {
    %c0_i32 = arith.constant 0 : i32
    %c0_i32_0 = arith.constant 0 : i32
    %c0_i32_1 = arith.constant 0 : i32
    return %c0_i32, %c0_i32_0 : i32, i32
  }
  func.func @transform_8(%arg0: i32) -> (i32, i32) {
    %c0_i32 = arith.constant 0 : i32
    %c0_i32_0 = arith.constant 0 : i32
    %c0_i32_1 = arith.constant 0 : i32
    return %c0_i32, %c0_i32_0 : i32, i32
  }
  func.func @transform_9(%arg0: i32) -> (i32, i32) {
    %c0_i32 = arith.constant 0 : i32
    %c0_i32_0 = arith.constant 0 : i32
    return %arg0, %c0_i32 : i32, i32
  }
}

</mosaic_0001>

<llo_original>
// kernel: tpu_custom_call.1
$region0: #{tpu_custom_call.1}
  #allocation0 [shape = 'u32[]', space=smem, size = 0x4, offset = 0x4, fixed_abs, tag = 'smem constant byte address 0x4 - core index']
  #allocation1 [shape = 'u32[144,128]{1,0:T(1,128)}', space=vmem, size = 0x12000, scoped, tag = 'internal scratch']
  %s0 = inlined_call_operand.vmem [shape: f32[16,8], index: 0, kind: input, shape index: {}]
  %s1 = inlined_call_operand.hbm [shape: f32[16,24], index: 1, kind: input, shape index: {}]
  %s2 = inlined_call_operand.vmem [shape: f32[8,64], index: 2, kind: input, shape index: {}]
  %s3 = inlined_call_operand.hbm [shape: f32[24,64], index: 3, kind: input, shape index: {}]
  %s4 = inlined_call_operand.vmem [shape: f32[1,64], index: 4, kind: input, shape index: {}]
  %s5 = inlined_call_operand.vmem [shape: f32[32,32], index: 5, kind: input, shape index: {}]
  %s6 = inlined_call_operand.vmem [shape: f32[1,32], index: 6, kind: input, shape index: {}]
  %s7 = inlined_call_operand.hbm [shape: f32[32,32], index: 7, kind: input, shape index: {}]
  %s8 = inlined_call_operand.vmem [shape: f32[1,32], index: 8, kind: input, shape index: {}]
  %s9 = inlined_call_operand.hbm [shape: f32[16,16], index: 9, kind: output, shape index: {}]
  %s10 = sld [smem:[#allocation0]]
  $region58: #{tpu_custom_call.1} parent=0
    _
  %s12 = ssub.s32 1, %s10
  %s13 = scalar_select 0, %s12, %s10
  $region1: #{tpu_custom_call.1} parent=0
    #allocation2 [shape = 'u8[8192]{0}', space=vmem, size = 0x2000, scoped, tag = 'input window, operand 1, single buffered']
    #allocation3 [shape = 's32[1]{0}', space=sflag, size = 0x4, scoped, tag = 'scoped memory for tpu_custom_call.1']
    #allocation4 [shape = 's32[1]{0}', space=sflag, size = 0x4, scoped, tag = 'scoped memory for tpu_custom_call.1']
    #allocation5 [shape = 'u8[12288]{0}', space=vmem, size = 0x3000, scoped, tag = 'input window, operand 3, single buffered']
    #allocation6 [shape = 's32[1]{0}', space=sflag, size = 0x4, scoped, tag = 'scoped memory for tpu_custom_call.1']
    #allocation7 [shape = 'u8[16384]{0}', space=vmem, size = 0x4000, scoped, tag = 'input window, operand 7, single buffered']
    #allocation8 [shape = 'u8[8192]{0}', space=vmem, size = 0x2000, scoped, tag = 'output window, operand 0, single buffered']
    %14 = vsyncpa [#allocation3], 0
    %15 = vsyncpa [#allocation6], 0
    %16 = vsyncpa [#allocation4], 0
    // Predicated region
    $region2: #{tpu_custom_call.1} parent=1 // pred_check
      _
    $region3: #{tpu_custom_call.1} parent=1 // pred_check_branch
      %18 = sbr.rel (0) target = $region5
    $region4: #{tpu_custom_call.1} parent=1 // pred_region
      _
    $region5: #{tpu_custom_call.1} parent=1 // pred_fallthru
      _
    // Predicated region
    $region6: #{tpu_custom_call.1} parent=1 // pred_check
      _
    $region7: #{tpu_custom_call.1} parent=1 // pred_check_branch
      %20 = sbr.rel (0) target = $region9
    $region8: #{tpu_custom_call.1} parent=1 // pred_region
      %s22 = ssub.s32 256, 256
      %23 = vsyncadd [#allocation3], %s22
      %s24 = sshll.u32 [#allocation2], 4
      %s25 = int_to_ptr.vmem [resolvable:$true] %s24
      %30 = dma.hbm_to_vmem [thread:$0]  %s1, 256, %s25, [#allocation3], 128, 128, 8
    $region9: #{tpu_custom_call.1} parent=1 // pred_fallthru
      _
    // Predicated region
    $region10: #{tpu_custom_call.1} parent=1 // pred_check
      _
    $region11: #{tpu_custom_call.1} parent=1 // pred_check_branch
      %32 = sbr.rel (0) target = $region13
    $region12: #{tpu_custom_call.1} parent=1 // pred_region
      _
    $region13: #{tpu_custom_call.1} parent=1 // pred_fallthru
      _
    // Predicated region
    $region14: #{tpu_custom_call.1} parent=1 // pred_check
      _
    $region15: #{tpu_custom_call.1} parent=1 // pred_check_branch
      %34 = sbr.rel (0) target = $region17
    $region16: #{tpu_custom_call.1} parent=1 // pred_region
      %s36 = ssub.s32 384, 384
      %37 = vsyncadd [#allocation6], %s36
      %s38 = sshll.u32 [#allocation5], 4
      %s39 = int_to_ptr.vmem [resolvable:$true] %s38
      %44 = dma.hbm_to_vmem [thread:$0]  %s3, 384, %s39, [#allocation6], 128, 128, 8
    $region17: #{tpu_custom_call.1} parent=1 // pred_fallthru
      _
    // Predicated region
    $region18: #{tpu_custom_call.1} parent=1 // pred_check
      _
    $region19: #{tpu_custom_call.1} parent=1 // pred_check_branch
      %46 = sbr.rel (0) target = $region21
    $region20: #{tpu_custom_call.1} parent=1 // pred_region
      _
    $region21: #{tpu_custom_call.1} parent=1 // pred_fallthru
      _
    // Predicated region
    $region22: #{tpu_custom_call.1} parent=1 // pred_check
      _
    $region23: #{tpu_custom_call.1} parent=1 // pred_check_branch
      %48 = sbr.rel (0) target = $region25
    $region24: #{tpu_custom_call.1} parent=1 // pred_region
      _
    $region25: #{tpu_custom_call.1} parent=1 // pred_fallthru
      _
    // Predicated region
    $region26: #{tpu_custom_call.1} parent=1 // pred_check
      _
    $region27: #{tpu_custom_call.1} parent=1 // pred_check_branch
      %50 = sbr.rel (0) target = $region29
    $region28: #{tpu_custom_call.1} parent=1 // pred_region
      _
    $region29: #{tpu_custom_call.1} parent=1 // pred_fallthru
      _
    // Predicated region
    $region30: #{tpu_custom_call.1} parent=1 // pred_check
      _
    $region31: #{tpu_custom_call.1} parent=1 // pred_check_branch
      %52 = sbr.rel (0) target = $region33
    $region32: #{tpu_custom_call.1} parent=1 // pred_region
      %s54 = ssub.s32 512, 512
      %55 = vsyncadd [#allocation6], %s54
      %s56 = sshll.u32 [#allocation7], 4
      %s57 = int_to_ptr.vmem [resolvable:$true] %s56
      %62 = dma.hbm_to_vmem [thread:$0]  %s7, 512, %s57, [#allocation6], 128, 128, 8
    $region33: #{tpu_custom_call.1} parent=1 // pred_fallthru
      _
    // Predicated region
    $region34: #{tpu_custom_call.1} parent=1 // pred_check
      _
    $region35: #{tpu_custom_call.1} parent=1 // pred_check_branch
      %64 = sbr.rel (0) target = $region37
    $region36: #{tpu_custom_call.1} parent=1 // pred_region
      _
    $region37: #{tpu_custom_call.1} parent=1 // pred_fallthru
      _
    // Predicated region
    $region38: #{tpu_custom_call.1} parent=1 // pred_check
      _
    $region39: #{tpu_custom_call.1} parent=1 // pred_check_branch
      %66 = sbr.rel (0) target = $region41
    $region40: #{tpu_custom_call.1} parent=1 // pred_region
      %67 = dma.done [#allocation3], 256
    $region41: #{tpu_custom_call.1} parent=1 // pred_fallthru
      _
    // Predicated region
    $region42: #{tpu_custom_call.1} parent=1 // pred_check
      _
    $region43: #{tpu_custom_call.1} parent=1 // pred_check_branch
      %69 = sbr.rel (0) target = $region45
    $region44: #{tpu_custom_call.1} parent=1 // pred_region
      %70 = dma.done [#allocation6], 384
    $region45: #{tpu_custom_call.1} parent=1 // pred_fallthru
      _
    // Predicated region
    $region46: #{tpu_custom_call.1} parent=1 // pred_check
      _
    $region47: #{tpu_custom_call.1} parent=1 // pred_check_branch
      %72 = sbr.rel (0) target = $region49
    $region48: #{tpu_custom_call.1} parent=1 // pred_region
      %73 = dma.done [#allocation6], 512
    $region49: #{tpu_custom_call.1} parent=1 // pred_fallthru
      _
    %v74 = vld [vmem:[%s0] sm:$0xff]
    %v75 = vld [vmem:[%s0 + $0x8] sm:$0xff]
    %v76 = vld [vmem:[#allocation2] sm:$0xff]
    %v77 = vld [vmem:[#allocation2 + $0x8] sm:$0xff]
    %v78 = vld [vmem:[%s2] sm:$0xff]
    %v79 = vld [vmem:[#allocation5] sm:$0xff]
    %v80 = vld [vmem:[#allocation5 + $0x8] sm:$0xff]
    %v81 = vld [vmem:[#allocation5 + $0x10] sm:$0xff]
    %vm82 = vcmask 195584
    %v84 = vsel %vm82, %v76, 0
    %v87 = vsel %vm82, %v77, 0
    %89 = vmatprep.subr.mxu0 0.0
    %90 = vmatpush1.msra.mxu0 %v79
    %91 = vmatprep.subr.mxu0 0.0
    %92 = vmatpush1.msra.mxu0 %v80
    %93 = vmatprep.subr.mxu0 0.0
    %94 = vmatpush1.msra.mxu0 %v81
    %95 = vmatprep.subr.mxu0 0.0
    %96 = vmatpush1.msra.mxu0 0.0
    %97 = vmatprep.subr.mxu0 0.0
    %98 = vmatpush1.msra.mxu0 0.0
    %99 = vmatprep.subr.mxu0 0.0
    %100 = vmatpush1.msra.mxu0 0.0
    %101 = vmatprep.subr.mxu0 0.0
    %102 = vmatpush1.msra.mxu0 0.0
    %103 = vmatprep.subr.mxu0 0.0
    %104 = vmatpush1.msra.mxu0 0.0
    %105 = vmatprep.subr.mxu0 0.0
    %106 = vmatpush1.msra.mxu0 0.0
    %107 = vmatprep.subr.mxu0 0.0
    %108 = vmatpush1.msra.mxu0 0.0
    %109 = vmatprep.subr.mxu0 0.0
    %110 = vmatpush1.msra.mxu0 0.0
    %111 = vmatprep.subr.mxu0 0.0
    %112 = vmatpush1.msra.mxu0 0.0
    %113 = vmatprep.subr.mxu0 0.0
    %114 = vmatpush1.msra.mxu0 0.0
    %115 = vmatprep.subr.mxu0 0.0
    %116 = vmatpush1.msra.mxu0 0.0
    %117 = vmatprep.subr.mxu0 0.0
    %118 = vmatpush1.msra.mxu0 0.0
    %119 = vmatprep.subr.mxu0 0.0
    %120 = vmatpush1.msra.mxu0 0.0
    %121 = vmatprep.subr.mxu0 0.0
    %122 = vmatpush1.msra.mxu0 0.0
    %123 = vmatprep.subr.mxu0 0.0
    %124 = vmatpush1.msra.mxu0 0.0
    %125 = vmatprep.subr.mxu0 0.0
    %126 = vmatpush1.msra.mxu0 0.0
    %127 = vmatprep.subr.mxu0 0.0
    %128 = vmatpush1.msra.mxu0 0.0
    %129 = vmatprep.subr.mxu0 0.0
    %130 = vmatpush1.msra.mxu0 0.0
    %131 = vmatprep.subr.mxu0 0.0
    %132 = vmatpush1.msra.mxu0 0.0
    %133 = vmatprep.subr.mxu0 0.0
    %134 = vmatpush1.msra.mxu0 0.0
    %135 = vmatprep.subr.mxu0 0.0
    %136 = vmatpush1.msra.mxu0 0.0
    %137 = vmatprep.subr.mxu0 0.0
    %138 = vmatpush1.msra.mxu0 0.0
    %139 = vmatprep.subr.mxu0 0.0
    %140 = vmatpush1.msra.mxu0 0.0
    %141 = vmatprep.subr.mxu0 0.0
    %142 = vmatpush1.msra.mxu0 0.0
    %143 = vmatprep.subr.mxu0 0.0
    %144 = vmatpush1.msra.mxu0 0.0
    %145 = vmatprep.subr.mxu0 0.0
    %146 = vmatpush1.msra.mxu0 0.0
    %147 = vmatprep.subr.mxu0 0.0
    %148 = vmatpush1.msra.mxu0 0.0
    %149 = vmatprep.subr.mxu0 0.0
    %150 = vmatpush1.msra.mxu0 0.0
    %151 = vmatprep.subr.mxu0 0.0
    %152 = vmatpush1.msra.mxu0 0.0
    %153 = vmatprep.mubr.f32.mxu0 0.0
    %154 = vmatmul.mubr.f32.gmra.mrb[0].mxu0 %v84
    %v155 = vpop.f32.mrb[0].mxu0
    %v156 = vadd.f32 0.0, %v155
    %v157 = vpop.f32.mrb[0].mxu0
    %158 = vmatprep.mubr.f32.mxu0 0.0
    %159 = vmatmul.mubr.f32.gmra.mrb[0].mxu0 %v87
    %v160 = vpop.f32.mrb[0].mxu0
    %v161 = vadd.f32 0.0, %v160
    %v162 = vpop.f32.mrb[0].mxu0
    %163 = vdwg.mxu0
    %vm164 = vcmask 64512
    %v166 = vsel %vm164, %v74, 0
    %v169 = vsel %vm164, %v75, 0
    %171 = vmatprep.subr.mxu0 0.0
    %172 = vmatpush1.msra.mxu0 %v78
    %173 = vmatprep.subr.mxu0 0.0
    %174 = vmatpush1.msra.mxu0 0.0
    %175 = vmatprep.subr.mxu0 0.0
    %176 = vmatpush1.msra.mxu0 0.0
    %177 = vmatprep.subr.mxu0 0.0
    %178 = vmatpush1.msra.mxu0 0.0
    %179 = vmatprep.subr.mxu0 0.0
    %180 = vmatpush1.msra.mxu0 0.0
    %181 = vmatprep.subr.mxu0 0.0
    %182 = vmatpush1.msra.mxu0 0.0
    %183 = vmatprep.subr.mxu0 0.0
    %184 = vmatpush1.msra.mxu0 0.0
    %185 = vmatprep.subr.mxu0 0.0
    %186 = vmatpush1.msra.mxu0 0.0
    %187 = vmatprep.subr.mxu0 0.0
    %188 = vmatpush1.msra.mxu0 0.0
    %189 = vmatprep.subr.mxu0 0.0
    %190 = vmatpush1.msra.mxu0 0.0
    %191 = vmatprep.subr.mxu0 0.0
    %192 = vmatpush1.msra.mxu0 0.0
    %193 = vmatprep.subr.mxu0 0.0
    %194 = vmatpush1.msra.mxu0 0.0
    %195 = vmatprep.subr.mxu0 0.0
    %196 = vmatpush1.msra.mxu0 0.0
    %197 = vmatprep.subr.mxu0 0.0
    %198 = vmatpush1.msra.mxu0 0.0
    %199 = vmatprep.subr.mxu0 0.0
    %200 = vmatpush1.msra.mxu0 0.0
    %201 = vmatprep.subr.mxu0 0.0
    %202 = vmatpush1.msra.mxu0 0.0
    %203 = vmatprep.subr.mxu0 0.0
    %204 = vmatpush1.msra.mxu0 0.0
    %205 = vmatprep.subr.mxu0 0.0
    %206 = vmatpush1.msra.mxu0 0.0
    %207 = vmatprep.subr.mxu0 0.0
    %208 = vmatpush1.msra.mxu0 0.0
    %209 = vmatprep.subr.mxu0 0.0
    %210 = vmatpush1.msra.mxu0 0.0
    %211 = vmatprep.subr.mxu0 0.0
    %212 = vmatpush1.msra.mxu0 0.0
    %213 = vmatprep.subr.mxu0 0.0
    %214 = vmatpush1.msra.mxu0 0.0
    %215 = vmatprep.subr.mxu0 0.0
    %216 = vmatpush1.msra.mxu0 0.0
    %217 = vmatprep.subr.mxu0 0.0
    %218 = vmatpush1.msra.mxu0 0.0
    %219 = vmatprep.subr.mxu0 0.0
    %220 = vmatpush1.msra.mxu0 0.0
    %221 = vmatprep.subr.mxu0 0.0
    %222 = vmatpush1.msra.mxu0 0.0
    %223 = vmatprep.subr.mxu0 0.0
    %224 = vmatpush1.msra.mxu0 0.0
    %225 = vmatprep.subr.mxu0 0.0
    %226 = vmatpush1.msra.mxu0 0.0
    %227 = vmatprep.subr.mxu0 0.0
    %228 = vmatpush1.msra.mxu0 0.0
    %229 = vmatprep.subr.mxu0 0.0
    %230 = vmatpush1.msra.mxu0 0.0
    %231 = vmatprep.subr.mxu0 0.0
    %232 = vmatpush1.msra.mxu0 0.0
    %233 = vmatprep.subr.mxu0 0.0
    %234 = vmatpush1.msra.mxu0 0.0
    %235 = vmatprep.mubr.f32.mxu0 0.0
    %236 = vmatmul.mubr.f32.gmra.mrb[0].mxu0 %v166
    %v237 = vpop.f32.mrb[0].mxu0
    %v238 = vadd.f32 %v156, %v237
    %v239 = vpop.f32.mrb[0].mxu0
    %240 = vmatprep.mubr.f32.mxu0 0.0
    %241 = vmatmul.mubr.f32.gmra.mrb[0].mxu0 %v169
    %v242 = vpop.f32.mrb[0].mxu0
    %v243 = vadd.f32 %v161, %v242
    %v244 = vpop.f32.mrb[0].mxu0
    %245 = vdwg.mxu0
    %v246 = vld [vmem:[%s4] sm:$0x1]
    %v248 = vlaneseq
    %v249 = vshrl.u32 %v248, 7
    %v250 = vsub.s32 0, %v249
    %v251 = vrot.slane %v246, %v250
    %v253 = vadd.f32 %v238, %v251
    %v254 = vadd.f32 %v243, %v251
    %v255 = vmax.f32 %v253, 0.0
    %v256 = vmax.f32 %v254, 0.0
    %v257 = vld [vmem:[%s5] sm:$0xff]
    %v258 = vld [vmem:[%s5 + $0x8] sm:$0xff]
    %v259 = vld [vmem:[%s5 + $0x10] sm:$0xff]
    %v260 = vld [vmem:[%s5 + $0x18] sm:$0xff]
    %v261 = vld [vmem:[%s6] sm:$0x1]
    %v263 = vlaneseq
    %v264 = vshrl.u32 %v263, 7
    %v265 = vsub.s32 0, %v264
    %v266 = vrot.slane %v261, %v265
    %vm268 = vcmask 261120
    %v270 = vsel %vm268, %v255, 0
    %v273 = vsel %vm268, %v256, 0
    %275 = vmatprep.subr.mxu0 0.0
    %276 = vmatpush1.msra.mxu0 %v257
    %277 = vmatprep.subr.mxu0 0.0
    %278 = vmatpush1.msra.mxu0 %v258
    %279 = vmatprep.subr.mxu0 0.0
    %280 = vmatpush1.msra.mxu0 %v259
    %281 = vmatprep.subr.mxu0 0.0
    %282 = vmatpush1.msra.mxu0 %v260
    %283 = vmatprep.subr.mxu0 0.0
    %284 = vmatpush1.msra.mxu0 0.0
    %285 = vmatprep.subr.mxu0 0.0
    %286 = vmatpush1.msra.mxu0 0.0
    %287 = vmatprep.subr.mxu0 0.0
    %288 = vmatpush1.msra.mxu0 0.0
    %289 = vmatprep.subr.mxu0 0.0
    %290 = vmatpush1.msra.mxu0 0.0
    %291 = vmatprep.subr.mxu0 0.0
    %292 = vmatpush1.msra.mxu0 0.0
    %293 = vmatprep.subr.mxu0 0.0
    %294 = vmatpush1.msra.mxu0 0.0
    %295 = vmatprep.subr.mxu0 0.0
    %296 = vmatpush1.msra.mxu0 0.0
    %297 = vmatprep.subr.mxu0 0.0
    %298 = vmatpush1.msra.mxu0 0.0
    %299 = vmatprep.subr.mxu0 0.0
    %300 = vmatpush1.msra.mxu0 0.0
    %301 = vmatprep.subr.mxu0 0.0
    %302 = vmatpush1.msra.mxu0 0.0
    %303 = vmatprep.subr.mxu0 0.0
    %304 = vmatpush1.msra.mxu0 0.0
    %305 = vmatprep.subr.mxu0 0.0
    %306 = vmatpush1.msra.mxu0 0.0
    %307 = vmatprep.subr.mxu0 0.0
    %308 = vmatpush1.msra.mxu0 0.0
    %309 = vmatprep.subr.mxu0 0.0
    %310 = vmatpush1.msra.mxu0 0.0
    %311 = vmatprep.subr.mxu0 0.0
    %312 = vmatpush1.msra.mxu0 0.0
    %313 = vmatprep.subr.mxu0 0.0
    %314 = vmatpush1.msra.mxu0 0.0
    %315 = vmatprep.subr.mxu0 0.0
    %316 = vmatpush1.msra.mxu0 0.0
    %317 = vmatprep.subr.mxu0 0.0
    %318 = vmatpush1.msra.mxu0 0.0
    %319 = vmatprep.subr.mxu0 0.0
    %320 = vmatpush1.msra.mxu0 0.0
    %321 = vmatprep.subr.mxu0 0.0
    %322 = vmatpush1.msra.mxu0 0.0
    %323 = vmatprep.subr.mxu0 0.0
    %324 = vmatpush1.msra.mxu0 0.0
    %325 = vmatprep.subr.mxu0 0.0
    %326 = vmatpush1.msra.mxu0 0.0
    %327 = vmatprep.subr.mxu0 0.0
    %328 = vmatpush1.msra.mxu0 0.0
    %329 = vmatprep.subr.mxu0 0.0
    %330 = vmatpush1.msra.mxu0 0.0
    %331 = vmatprep.subr.mxu0 0.0
    %332 = vmatpush1.msra.mxu0 0.0
    %333 = vmatprep.subr.mxu0 0.0
    %334 = vmatpush1.msra.mxu0 0.0
    %335 = vmatprep.subr.mxu0 0.0
    %336 = vmatpush1.msra.mxu0 0.0
    %337 = vmatprep.subr.mxu0 0.0
    %338 = vmatpush1.msra.mxu0 0.0
    %339 = vmatprep.mubr.f32.mxu0 0.0
    %340 = vmatmul.mubr.f32.gmra.mrb[0].mxu0 %v270
    %v341 = vpop.f32.mrb[0].mxu0
    %v342 = vadd.f32 %v266, %v341
    %v343 = vpop.f32.mrb[0].mxu0
    %344 = vmatprep.mubr.f32.mxu0 0.0
    %345 = vmatmul.mubr.f32.gmra.mrb[0].mxu0 %v273
    %v346 = vpop.f32.mrb[0].mxu0
    %v347 = vadd.f32 %v266, %v346
    %v348 = vpop.f32.mrb[0].mxu0
    %349 = vdwg.mxu0
    %v350 = vmax.f32 %v342, 0.0
    %v351 = vmax.f32 %v347, 0.0
    %v352 = vld [vmem:[#allocation7] sm:$0xff]
    %v353 = vld [vmem:[#allocation7 + $0x8] sm:$0xff]
    %v354 = vld [vmem:[#allocation7 + $0x10] sm:$0xff]
    %v355 = vld [vmem:[#allocation7 + $0x18] sm:$0xff]
    %v356 = vld [vmem:[%s8] sm:$0x1]
    %v358 = vlaneseq
    %v359 = vshrl.u32 %v358, 7
    %v360 = vsub.s32 0, %v359
    %v361 = vrot.slane %v356, %v360
    %363 = vrot.lane.b32.xlu0 %v255, 96
    %v364 = vpop.permute.xlu0 %363
    %365 = vrot.lane.b32.xlu0 %v256, 96
    %v366 = vpop.permute.xlu0 %365
    %v367 = vsel %vm268, %v364, 0
    %v369 = vsel %vm268, %v366, 0
    %371 = vmatprep.subr.mxu0 0.0
    %372 = vmatpush1.msra.mxu0 %v352
    %373 = vmatprep.subr.mxu0 0.0
    %374 = vmatpush1.msra.mxu0 %v353
    %375 = vmatprep.subr.mxu0 0.0
    %376 = vmatpush1.msra.mxu0 %v354
    %377 = vmatprep.subr.mxu0 0.0
    %378 = vmatpush1.msra.mxu0 %v355
    %379 = vmatprep.subr.mxu0 0.0
    %380 = vmatpush1.msra.mxu0 0.0
    %381 = vmatprep.subr.mxu0 0.0
    %382 = vmatpush1.msra.mxu0 0.0
    %383 = vmatprep.subr.mxu0 0.0
    %384 = vmatpush1.msra.mxu0 0.0
    %385 = vmatprep.subr.mxu0 0.0
    %386 = vmatpush1.msra.mxu0 0.0
    %387 = vmatprep.subr.mxu0 0.0
    %388 = vmatpush1.msra.mxu0 0.0
    %389 = vmatprep.subr.mxu0 0.0
    %390 = vmatpush1.msra.mxu0 0.0
    %391 = vmatprep.subr.mxu0 0.0
    %392 = vmatpush1.msra.mxu0 0.0
    %393 = vmatprep.subr.mxu0 0.0
    %394 = vmatpush1.msra.mxu0 0.0
    %395 = vmatprep.subr.mxu0 0.0
    %396 = vmatpush1.msra.mxu0 0.0
    %397 = vmatprep.subr.mxu0 0.0
    %398 = vmatpush1.msra.mxu0 0.0
    %399 = vmatprep.subr.mxu0 0.0
    %400 = vmatpush1.msra.mxu0 0.0
    %401 = vmatprep.subr.mxu0 0.0
    %402 = vmatpush1.msra.mxu0 0.0
    %403 = vmatprep.subr.mxu0 0.0
    %404 = vmatpush1.msra.mxu0 0.0
    %405 = vmatprep.subr.mxu0 0.0
    %406 = vmatpush1.msra.mxu0 0.0
    %407 = vmatprep.subr.mxu0 0.0
    %408 = vmatpush1.msra.mxu0 0.0
    %409 = vmatprep.subr.mxu0 0.0
    %410 = vmatpush1.msra.mxu0 0.0
    %411 = vmatprep.subr.mxu0 0.0
    %412 = vmatpush1.msra.mxu0 0.0
    %413 = vmatprep.subr.mxu0 0.0
    %414 = vmatpush1.msra.mxu0 0.0
    %415 = vmatprep.subr.mxu0 0.0
    %416 = vmatpush1.msra.mxu0 0.0
    %417 = vmatprep.subr.mxu0 0.0
    %418 = vmatpush1.msra.mxu0 0.0
    %419 = vmatprep.subr.mxu0 0.0
    %420 = vmatpush1.msra.mxu0 0.0
    %421 = vmatprep.subr.mxu0 0.0
    %422 = vmatpush1.msra.mxu0 0.0
    %423 = vmatprep.subr.mxu0 0.0
    %424 = vmatpush1.msra.mxu0 0.0
    %425 = vmatprep.subr.mxu0 0.0
    %426 = vmatpush1.msra.mxu0 0.0
    %427 = vmatprep.subr.mxu0 0.0
    %428 = vmatpush1.msra.mxu0 0.0
    %429 = vmatprep.subr.mxu0 0.0
    %430 = vmatpush1.msra.mxu0 0.0
    %431 = vmatprep.subr.mxu0 0.0
    %432 = vmatpush1.msra.mxu0 0.0
    %433 = vmatprep.subr.mxu0 0.0
    %434 = vmatpush1.msra.mxu0 0.0
    %435 = vmatprep.mubr.f32.mxu0 0.0
    %436 = vmatmul.mubr.f32.gmra.mrb[0].mxu0 %v367
    %v437 = vpop.f32.mrb[0].mxu0
    %v438 = vadd.f32 %v361, %v437
    %v439 = vpop.f32.mrb[0].mxu0
    %440 = vmatprep.mubr.f32.mxu0 0.0
    %441 = vmatmul.mubr.f32.gmra.mrb[0].mxu0 %v369
    %v442 = vpop.f32.mrb[0].mxu0
    %v443 = vadd.f32 %v361, %v442
    %v444 = vpop.f32.mrb[0].mxu0
    %445 = vdwg.mxu0
    %v446 = vmax.f32 %v438, 0.0
    %v447 = vmax.f32 %v443, 0.0
    %450 = vrot.lane.b32.xlu0 %v350, 120
    %v451 = vpop.permute.xlu0 %450
    %452 = vrot.lane.b32.xlu0 %v351, 120
    %v453 = vpop.permute.xlu0 %452
    %456 = vrot.lane.b32.xlu0 %v350, 112
    %v457 = vpop.permute.xlu0 %456
    %458 = vrot.lane.b32.xlu0 %v351, 112
    %v459 = vpop.permute.xlu0 %458
    %462 = vrot.lane.b32.xlu0 %v350, 104
    %v463 = vpop.permute.xlu0 %462
    %464 = vrot.lane.b32.xlu0 %v351, 104
    %v465 = vpop.permute.xlu0 %464
    %v468 = vcombine.low %v350, %v457
    %v469 = vcombine.high %v350, %v457
    %v471 = vunpack.c.l.s4 1983009808
    %v472 = vunpack.c.0.s8 %v471
    %v473 = vlaneseq
    %v474 = vshrl.u32 %v473, 7
    %v475 = vsub.s32 %v472, %v474
    %v476 = vrot.slane %v468, %v475
    %v478 = vunpack.c.l.s4 1983009808
    %v479 = vunpack.c.0.s8 %v478
    %v480 = vlaneseq
    %v481 = vshrl.u32 %v480, 7
    %v482 = vsub.s32 %v479, %v481
    %v483 = vrot.slane %v469, %v482
    %v484 = vcombine.low %v451, %v463
    %v485 = vcombine.high %v451, %v463
    %v487 = vunpack.c.l.s4 1983009808
    %v488 = vunpack.c.0.s8 %v487
    %v489 = vlaneseq
    %v490 = vshrl.u32 %v489, 7
    %v491 = vsub.s32 %v488, %v490
    %v492 = vrot.slane %v484, %v491
    %v494 = vunpack.c.l.s4 1983009808
    %v495 = vunpack.c.0.s8 %v494
    %v496 = vlaneseq
    %v497 = vshrl.u32 %v496, 7
    %v498 = vsub.s32 %v495, %v497
    %v499 = vrot.slane %v485, %v498
    %v500 = vcombine.low %v476, %v492
    %v501 = vcombine.high %v476, %v492
    %v503 = vunpack.c.l.s4 1934713408
    %v504 = vunpack.c.0.s8 %v503
    %v505 = vlaneseq
    %v506 = vshrl.u32 %v505, 7
    %v507 = vsub.s32 %v504, %v506
    %v508 = vrot.slane %v500, %v507
    %v510 = vunpack.c.l.s4 1934713408
    %v511 = vunpack.c.0.s8 %v510
    %v512 = vlaneseq
    %v513 = vshrl.u32 %v512, 7
    %v514 = vsub.s32 %v511, %v513
    %v515 = vrot.slane %v501, %v514
    %v516 = vcombine.low %v483, %v499
    %v517 = vcombine.high %v483, %v499
    %v519 = vunpack.c.l.s4 1934713408
    %v520 = vunpack.c.0.s8 %v519
    %v521 = vlaneseq
    %v522 = vshrl.u32 %v521, 7
    %v523 = vsub.s32 %v520, %v522
    %v524 = vrot.slane %v516, %v523
    %v526 = vunpack.c.l.s4 1934713408
    %v527 = vunpack.c.0.s8 %v526
    %v528 = vlaneseq
    %v529 = vshrl.u32 %v528, 7
    %v530 = vsub.s32 %v527, %v529
    %v531 = vrot.slane %v517, %v530
    %v532 = vcombine.high %v508, 0.0
    %v533 = vcombine.high %v515, 0.0
    %v534 = vcombine.high %v524, 0.0
    %v535 = vcombine.high %v531, 0.0
    %v536 = vcombine.low %v351, %v459
    %v537 = vcombine.high %v351, %v459
    %v539 = vunpack.c.l.s4 1983009808
    %v540 = vunpack.c.0.s8 %v539
    %v541 = vlaneseq
    %v542 = vshrl.u32 %v541, 7
    %v543 = vsub.s32 %v540, %v542
    %v544 = vrot.slane %v536, %v543
    %v546 = vunpack.c.l.s4 1983009808
    %v547 = vunpack.c.0.s8 %v546
    %v548 = vlaneseq
    %v549 = vshrl.u32 %v548, 7
    %v550 = vsub.s32 %v547, %v549
    %v551 = vrot.slane %v537, %v550
    %v552 = vcombine.low %v453, %v465
    %v553 = vcombine.high %v453, %v465
    %v555 = vunpack.c.l.s4 1983009808
    %v556 = vunpack.c.0.s8 %v555
    %v557 = vlaneseq
    %v558 = vshrl.u32 %v557, 7
    %v559 = vsub.s32 %v556, %v558
    %v560 = vrot.slane %v552, %v559
    %v562 = vunpack.c.l.s4 1983009808
    %v563 = vunpack.c.0.s8 %v562
    %v564 = vlaneseq
    %v565 = vshrl.u32 %v564, 7
    %v566 = vsub.s32 %v563, %v565
    %v567 = vrot.slane %v553, %v566
    %v568 = vcombine.low %v544, %v560
    %v569 = vcombine.high %v544, %v560
    %v571 = vunpack.c.l.s4 1934713408
    %v572 = vunpack.c.0.s8 %v571
    %v573 = vlaneseq
    %v574 = vshrl.u32 %v573, 7
    %v575 = vsub.s32 %v572, %v574
    %v576 = vrot.slane %v568, %v575
    %v578 = vunpack.c.l.s4 1934713408
    %v579 = vunpack.c.0.s8 %v578
    %v580 = vlaneseq
    %v581 = vshrl.u32 %v580, 7
    %v582 = vsub.s32 %v579, %v581
    %v583 = vrot.slane %v569, %v582
    %v584 = vcombine.low %v551, %v567
    %v585 = vcombine.high %v551, %v567
    %v587 = vunpack.c.l.s4 1934713408
    %v588 = vunpack.c.0.s8 %v587
    %v589 = vlaneseq
    %v590 = vshrl.u32 %v589, 7
    %v591 = vsub.s32 %v588, %v590
    %v592 = vrot.slane %v584, %v591
    %v594 = vunpack.c.l.s4 1934713408
    %v595 = vunpack.c.0.s8 %v594
    %v596 = vlaneseq
    %v597 = vshrl.u32 %v596, 7
    %v598 = vsub.s32 %v595, %v597
    %v599 = vrot.slane %v585, %v598
    %v600 = vcombine.high %v576, 0.0
    %v601 = vcombine.high %v583, 0.0
    %v602 = vcombine.high %v592, 0.0
    %v603 = vcombine.high %v599, 0.0
    %606 = vrot.lane.b32.xlu0 %v446, 120
    %v607 = vpop.permute.xlu0 %606
    %608 = vrot.lane.b32.xlu0 %v447, 120
    %v609 = vpop.permute.xlu0 %608
    %612 = vrot.lane.b32.xlu0 %v446, 112
    %v613 = vpop.permute.xlu0 %612
    %614 = vrot.lane.b32.xlu0 %v447, 112
    %v615 = vpop.permute.xlu0 %614
    %618 = vrot.lane.b32.xlu0 %v446, 104
    %v619 = vpop.permute.xlu0 %618
    %620 = vrot.lane.b32.xlu0 %v447, 104
    %v621 = vpop.permute.xlu0 %620
    %v624 = vcombine.low %v446, %v613
    %v625 = vcombine.high %v446, %v613
    %v627 = vunpack.c.l.s4 1983009808
    %v628 = vunpack.c.0.s8 %v627
    %v629 = vlaneseq
    %v630 = vshrl.u32 %v629, 7
    %v631 = vsub.s32 %v628, %v630
    %v632 = vrot.slane %v624, %v631
    %v634 = vunpack.c.l.s4 1983009808
    %v635 = vunpack.c.0.s8 %v634
    %v636 = vlaneseq
    %v637 = vshrl.u32 %v636, 7
    %v638 = vsub.s32 %v635, %v637
    %v639 = vrot.slane %v625, %v638
    %v640 = vcombine.low %v607, %v619
    %v641 = vcombine.high %v607, %v619
    %v643 = vunpack.c.l.s4 1983009808
    %v644 = vunpack.c.0.s8 %v643
    %v645 = vlaneseq
    %v646 = vshrl.u32 %v645, 7
    %v647 = vsub.s32 %v644, %v646
    %v648 = vrot.slane %v640, %v647
    %v650 = vunpack.c.l.s4 1983009808
    %v651 = vunpack.c.0.s8 %v650
    %v652 = vlaneseq
    %v653 = vshrl.u32 %v652, 7
    %v654 = vsub.s32 %v651, %v653
    %v655 = vrot.slane %v641, %v654
    %v656 = vcombine.low %v632, %v648
    %v657 = vcombine.high %v632, %v648
    %v659 = vunpack.c.l.s4 1934713408
    %v660 = vunpack.c.0.s8 %v659
    %v661 = vlaneseq
    %v662 = vshrl.u32 %v661, 7
    %v663 = vsub.s32 %v660, %v662
    %v664 = vrot.slane %v656, %v663
    %v666 = vunpack.c.l.s4 1934713408
    %v667 = vunpack.c.0.s8 %v666
    %v668 = vlaneseq
    %v669 = vshrl.u32 %v668, 7
    %v670 = vsub.s32 %v667, %v669
    %v671 = vrot.slane %v657, %v670
    %v672 = vcombine.low %v639, %v655
    %v673 = vcombine.high %v639, %v655
    %v675 = vunpack.c.l.s4 1934713408
    %v676 = vunpack.c.0.s8 %v675
    %v677 = vlaneseq
    %v678 = vshrl.u32 %v677, 7
    %v679 = vsub.s32 %v676, %v678
    %v680 = vrot.slane %v672, %v679
    %v682 = vunpack.c.l.s4 1934713408
    %v683 = vunpack.c.0.s8 %v682
    %v684 = vlaneseq
    %v685 = vshrl.u32 %v684, 7
    %v686 = vsub.s32 %v683, %v685
    %v687 = vrot.slane %v673, %v686
    %v688 = vcombine.high %v664, 0.0
    %v689 = vcombine.high %v671, 0.0
    %v690 = vcombine.high %v680, 0.0
    %v691 = vcombine.high %v687, 0.0
    %v692 = vcombine.low %v447, %v615
    %v693 = vcombine.high %v447, %v615
    %v695 = vunpack.c.l.s4 1983009808
    %v696 = vunpack.c.0.s8 %v695
    %v697 = vlaneseq
    %v698 = vshrl.u32 %v697, 7
    %v699 = vsub.s32 %v696, %v698
    %v700 = vrot.slane %v692, %v699
    %v702 = vunpack.c.l.s4 1983009808
    %v703 = vunpack.c.0.s8 %v702
    %v704 = vlaneseq
    %v705 = vshrl.u32 %v704, 7
    %v706 = vsub.s32 %v703, %v705
    %v707 = vrot.slane %v693, %v706
    %v708 = vcombine.low %v609, %v621
    %v709 = vcombine.high %v609, %v621
    %v711 = vunpack.c.l.s4 1983009808
    %v712 = vunpack.c.0.s8 %v711
    %v713 = vlaneseq
    %v714 = vshrl.u32 %v713, 7
    %v715 = vsub.s32 %v712, %v714
    %v716 = vrot.slane %v708, %v715
    %v718 = vunpack.c.l.s4 1983009808
    %v719 = vunpack.c.0.s8 %v718
    %v720 = vlaneseq
    %v721 = vshrl.u32 %v720, 7
    %v722 = vsub.s32 %v719, %v721
    %v723 = vrot.slane %v709, %v722
    %v724 = vcombine.low %v700, %v716
    %v725 = vcombine.high %v700, %v716
    %v727 = vunpack.c.l.s4 1934713408
    %v728 = vunpack.c.0.s8 %v727
    %v729 = vlaneseq
    %v730 = vshrl.u32 %v729, 7
    %v731 = vsub.s32 %v728, %v730
    %v732 = vrot.slane %v724, %v731
    %v734 = vunpack.c.l.s4 1934713408
    %v735 = vunpack.c.0.s8 %v734
    %v736 = vlaneseq
    %v737 = vshrl.u32 %v736, 7
    %v738 = vsub.s32 %v735, %v737
    %v739 = vrot.slane %v725, %v738
    %v740 = vcombine.low %v707, %v723
    %v741 = vcombine.high %v707, %v723
    %v743 = vunpack.c.l.s4 1934713408
    %v744 = vunpack.c.0.s8 %v743
    %v745 = vlaneseq
    %v746 = vshrl.u32 %v745, 7
    %v747 = vsub.s32 %v744, %v746
    %v748 = vrot.slane %v740, %v747
    %v750 = vunpack.c.l.s4 1934713408
    %v751 = vunpack.c.0.s8 %v750
    %v752 = vlaneseq
    %v753 = vshrl.u32 %v752, 7
    %v754 = vsub.s32 %v751, %v753
    %v755 = vrot.slane %v741, %v754
    %v756 = vcombine.high %v732, 0.0
    %v757 = vcombine.high %v739, 0.0
    %v758 = vcombine.high %v748, 0.0
    %v759 = vcombine.high %v755, 0.0
    %v761 = vsel %vm164, %v508, 0
    %v764 = vsel %vm164, %v664, 0
    %766 = vmatprep.subr.mxu0 0.0
    %767 = vmatpush1.xpose.msra.mxu0 %v764
    %768 = vmatprep.subr.mxu0 0.0
    %769 = vmatpush1.xpose.msra.mxu0 0.0
    %770 = vmatprep.subr.mxu0 0.0
    %771 = vmatpush1.xpose.msra.mxu0 0.0
    %772 = vmatprep.subr.mxu0 0.0
    %773 = vmatpush1.xpose.msra.mxu0 0.0
    %774 = vmatprep.subr.mxu0 0.0
    %775 = vmatpush1.xpose.msra.mxu0 0.0
    %776 = vmatprep.subr.mxu0 0.0
    %777 = vmatpush1.xpose.msra.mxu0 0.0
    %778 = vmatprep.subr.mxu0 0.0
    %779 = vmatpush1.xpose.msra.mxu0 0.0
    %780 = vmatprep.subr.mxu0 0.0
    %781 = vmatpush1.xpose.msra.mxu0 0.0
    %782 = vmatprep.subr.mxu0 0.0
    %783 = vmatpush1.xpose.msra.mxu0 0.0
    %784 = vmatprep.subr.mxu0 0.0
    %785 = vmatpush1.xpose.msra.mxu0 0.0
    %786 = vmatprep.subr.mxu0 0.0
    %787 = vmatpush1.xpose.msra.mxu0 0.0
    %788 = vmatprep.subr.mxu0 0.0
    %789 = vmatpush1.xpose.msra.mxu0 0.0
    %790 = vmatprep.subr.mxu0 0.0
    %791 = vmatpush1.xpose.msra.mxu0 0.0
    %792 = vmatprep.subr.mxu0 0.0
    %793 = vmatpush1.xpose.msra.mxu0 0.0
    %794 = vmatprep.subr.mxu0 0.0
    %795 = vmatpush1.xpose.msra.mxu0 0.0
    %796 = vmatprep.subr.mxu0 0.0
    %797 = vmatpush1.xpose.msra.mxu0 0.0
    %798 = vmatprep.subr.mxu0 0.0
    %799 = vmatpush1.xpose.msra.mxu0 0.0
    %800 = vmatprep.subr.mxu0 0.0
    %801 = vmatpush1.xpose.msra.mxu0 0.0
    %802 = vmatprep.subr.mxu0 0.0
    %803 = vmatpush1.xpose.msra.mxu0 0.0
    %804 = vmatprep.subr.mxu0 0.0
    %805 = vmatpush1.xpose.msra.mxu0 0.0
    %806 = vmatprep.subr.mxu0 0.0
    %807 = vmatpush1.xpose.msra.mxu0 0.0
    %808 = vmatprep.subr.mxu0 0.0
    %809 = vmatpush1.xpose.msra.mxu0 0.0
    %810 = vmatprep.subr.mxu0 0.0
    %811 = vmatpush1.xpose.msra.mxu0 0.0
    %812 = vmatprep.subr.mxu0 0.0
    %813 = vmatpush1.xpose.msra.mxu0 0.0
    %814 = vmatprep.subr.mxu0 0.0
    %815 = vmatpush1.xpose.msra.mxu0 0.0
    %816 = vmatprep.subr.mxu0 0.0
    %817 = vmatpush1.xpose.msra.mxu0 0.0
    %818 = vmatprep.subr.mxu0 0.0
    %819 = vmatpush1.xpose.msra.mxu0 0.0
    %820 = vmatprep.subr.mxu0 0.0
    %821 = vmatpush1.xpose.msra.mxu0 0.0
    %822 = vmatprep.subr.mxu0 0.0
    %823 = vmatpush1.xpose.msra.mxu0 0.0
    %824 = vmatprep.subr.mxu0 0.0
    %825 = vmatpush1.xpose.msra.mxu0 0.0
    %826 = vmatprep.subr.mxu0 0.0
    %827 = vmatpush1.xpose.msra.mxu0 0.0
    %828 = vmatprep.subr.mxu0 0.0
    %829 = vmatpush1.xpose.msra.mxu0 0.0
    %830 = vmatprep.mubr.f32.mxu0 0.0
    %831 = vmatmul.mubr.f32.gmra.mrb[0].mxu0 %v761
    %v832 = vpop.f32.mrb[0].mxu0
    %v833 = vadd.f32 0.0, %v832
    %v834 = vpop.f32.mrb[0].mxu0
    %835 = vdwg.mxu0
    %v837 = vsel %vm164, %v532, 0
    %v840 = vsel %vm164, %v688, 0
    %842 = vmatprep.subr.mxu0 0.0
    %843 = vmatpush1.xpose.msra.mxu0 %v840
    %844 = vmatprep.subr.mxu0 0.0
    %845 = vmatpush1.xpose.msra.mxu0 0.0
    %846 = vmatprep.subr.mxu0 0.0
    %847 = vmatpush1.xpose.msra.mxu0 0.0
    %848 = vmatprep.subr.mxu0 0.0
    %849 = vmatpush1.xpose.msra.mxu0 0.0
    %850 = vmatprep.subr.mxu0 0.0
    %851 = vmatpush1.xpose.msra.mxu0 0.0
    %852 = vmatprep.subr.mxu0 0.0
    %853 = vmatpush1.xpose.msra.mxu0 0.0
    %854 = vmatprep.subr.mxu0 0.0
    %855 = vmatpush1.xpose.msra.mxu0 0.0
    %856 = vmatprep.subr.mxu0 0.0
    %857 = vmatpush1.xpose.msra.mxu0 0.0
    %858 = vmatprep.subr.mxu0 0.0
    %859 = vmatpush1.xpose.msra.mxu0 0.0
    %860 = vmatprep.subr.mxu0 0.0
    %861 = vmatpush1.xpose.msra.mxu0 0.0
    %862 = vmatprep.subr.mxu0 0.0
    %863 = vmatpush1.xpose.msra.mxu0 0.0
    %864 = vmatprep.subr.mxu0 0.0
    %865 = vmatpush1.xpose.msra.mxu0 0.0
    %866 = vmatprep.subr.mxu0 0.0
    %867 = vmatpush1.xpose.msra.mxu0 0.0
    %868 = vmatprep.subr.mxu0 0.0
    %869 = vmatpush1.xpose.msra.mxu0 0.0
    %870 = vmatprep.subr.mxu0 0.0
    %871 = vmatpush1.xpose.msra.mxu0 0.0
    %872 = vmatprep.subr.mxu0 0.0
    %873 = vmatpush1.xpose.msra.mxu0 0.0
    %874 = vmatprep.subr.mxu0 0.0
    %875 = vmatpush1.xpose.msra.mxu0 0.0
    %876 = vmatprep.subr.mxu0 0.0
    %877 = vmatpush1.xpose.msra.mxu0 0.0
    %878 = vmatprep.subr.mxu0 0.0
    %879 = vmatpush1.xpose.msra.mxu0 0.0
    %880 = vmatprep.subr.mxu0 0.0
    %881 = vmatpush1.xpose.msra.mxu0 0.0
    %882 = vmatprep.subr.mxu0 0.0
    %883 = vmatpush1.xpose.msra.mxu0 0.0
    %884 = vmatprep.subr.mxu0 0.0
    %885 = vmatpush1.xpose.msra.mxu0 0.0
    %886 = vmatprep.subr.mxu0 0.0
    %887 = vmatpush1.xpose.msra.mxu0 0.0
    %888 = vmatprep.subr.mxu0 0.0
    %889 = vmatpush1.xpose.msra.mxu0 0.0
    %890 = vmatprep.subr.mxu0 0.0
    %891 = vmatpush1.xpose.msra.mxu0 0.0
    %892 = vmatprep.subr.mxu0 0.0
    %893 = vmatpush1.xpose.msra.mxu0 0.0
    %894 = vmatprep.subr.mxu0 0.0
    %895 = vmatpush1.xpose.msra.mxu0 0.0
    %896 = vmatprep.subr.mxu0 0.0
    %897 = vmatpush1.xpose.msra.mxu0 0.0
    %898 = vmatprep.subr.mxu0 0.0
    %899 = vmatpush1.xpose.msra.mxu0 0.0
    %900 = vmatprep.subr.mxu0 0.0
    %901 = vmatpush1.xpose.msra.mxu0 0.0
    %902 = vmatprep.subr.mxu0 0.0
    %903 = vmatpush1.xpose.msra.mxu0 0.0
    %904 = vmatprep.subr.mxu0 0.0
    %905 = vmatpush1.xpose.msra.mxu0 0.0
    %906 = vmatprep.mubr.f32.mxu0 0.0
    %907 = vmatmul.mubr.f32.gmra.mrb[0].mxu0 %v837
    %v908 = vpop.f32.mrb[0].mxu0
    %v909 = vadd.f32 0.0, %v908
    %v910 = vpop.f32.mrb[0].mxu0
    %911 = vdwg.mxu0
    %v913 = vsel %vm164, %v515, 0
    %v916 = vsel %vm164, %v671, 0
    %918 = vmatprep.subr.mxu0 0.0
    %919 = vmatpush1.xpose.msra.mxu0 %v916
    %920 = vmatprep.subr.mxu0 0.0
    %921 = vmatpush1.xpose.msra.mxu0 0.0
    %922 = vmatprep.subr.mxu0 0.0
    %923 = vmatpush1.xpose.msra.mxu0 0.0
    %924 = vmatprep.subr.mxu0 0.0
    %925 = vmatpush1.xpose.msra.mxu0 0.0
    %926 = vmatprep.subr.mxu0 0.0
    %927 = vmatpush1.xpose.msra.mxu0 0.0
    %928 = vmatprep.subr.mxu0 0.0
    %929 = vmatpush1.xpose.msra.mxu0 0.0
    %930 = vmatprep.subr.mxu0 0.0
    %931 = vmatpush1.xpose.msra.mxu0 0.0
    %932 = vmatprep.subr.mxu0 0.0
    %933 = vmatpush1.xpose.msra.mxu0 0.0
    %934 = vmatprep.subr.mxu0 0.0
    %935 = vmatpush1.xpose.msra.mxu0 0.0
    %936 = vmatprep.subr.mxu0 0.0
    %937 = vmatpush1.xpose.msra.mxu0 0.0
    %938 = vmatprep.subr.mxu0 0.0
    %939 = vmatpush1.xpose.msra.mxu0 0.0
    %940 = vmatprep.subr.mxu0 0.0
    %941 = vmatpush1.xpose.msra.mxu0 0.0
    %942 = vmatprep.subr.mxu0 0.0
    %943 = vmatpush1.xpose.msra.mxu0 0.0
    %944 = vmatprep.subr.mxu0 0.0
    %945 = vmatpush1.xpose.msra.mxu0 0.0
    %946 = vmatprep.subr.mxu0 0.0
    %947 = vmatpush1.xpose.msra.mxu0 0.0
    %948 = vmatprep.subr.mxu0 0.0
    %949 = vmatpush1.xpose.msra.mxu0 0.0
    %950 = vmatprep.subr.mxu0 0.0
    %951 = vmatpush1.xpose.msra.mxu0 0.0
    %952 = vmatprep.subr.mxu0 0.0
    %953 = vmatpush1.xpose.msra.mxu0 0.0
    %954 = vmatprep.subr.mxu0 0.0
    %955 = vmatpush1.xpose.msra.mxu0 0.0
    %956 = vmatprep.subr.mxu0 0.0
    %957 = vmatpush1.xpose.msra.mxu0 0.0
    %958 = vmatprep.subr.mxu0 0.0
    %959 = vmatpush1.xpose.msra.mxu0 0.0
    %960 = vmatprep.subr.mxu0 0.0
    %961 = vmatpush1.xpose.msra.mxu0 0.0
    %962 = vmatprep.subr.mxu0 0.0
    %963 = vmatpush1.xpose.msra.mxu0 0.0
    %964 = vmatprep.subr.mxu0 0.0
    %965 = vmatpush1.xpose.msra.mxu0 0.0
    %966 = vmatprep.subr.mxu0 0.0
    %967 = vmatpush1.xpose.msra.mxu0 0.0
    %968 = vmatprep.subr.mxu0 0.0
    %969 = vmatpush1.xpose.msra.mxu0 0.0
    %970 = vmatprep.subr.mxu0 0.0
    %971 = vmatpush1.xpose.msra.mxu0 0.0
    %972 = vmatprep.subr.mxu0 0.0
    %973 = vmatpush1.xpose.msra.mxu0 0.0
    %974 = vmatprep.subr.mxu0 0.0
    %975 = vmatpush1.xpose.msra.mxu0 0.0
    %976 = vmatprep.subr.mxu0 0.0
    %977 = vmatpush1.xpose.msra.mxu0 0.0
    %978 = vmatprep.subr.mxu0 0.0
    %979 = vmatpush1.xpose.msra.mxu0 0.0
    %980 = vmatprep.subr.mxu0 0.0
    %981 = vmatpush1.xpose.msra.mxu0 0.0
    %982 = vmatprep.mubr.f32.mxu0 0.0
    %983 = vmatmul.mubr.f32.gmra.mrb[0].mxu0 %v913
    %v984 = vpop.f32.mrb[0].mxu0
    %v985 = vadd.f32 0.0, %v984
    %v986 = vpop.f32.mrb[0].mxu0
    %987 = vdwg.mxu0
    %v989 = vsel %vm164, %v533, 0
    %v992 = vsel %vm164, %v689, 0
    %994 = vmatprep.subr.mxu0 0.0
    %995 = vmatpush1.xpose.msra.mxu0 %v992
    %996 = vmatprep.subr.mxu0 0.0
    %997 = vmatpush1.xpose.msra.mxu0 0.0
    %998 = vmatprep.subr.mxu0 0.0
    %999 = vmatpush1.xpose.msra.mxu0 0.0
    %1000 = vmatprep.subr.mxu0 0.0
    %1001 = vmatpush1.xpose.msra.mxu0 0.0
    %1002 = vmatprep.subr.mxu0 0.0
    %1003 = vmatpush1.xpose.msra.mxu0 0.0
    %1004 = vmatprep.subr.mxu0 0.0
    %1005 = vmatpush1.xpose.msra.mxu0 0.0
    %1006 = vmatprep.subr.mxu0 0.0
    %1007 = vmatpush1.xpose.msra.mxu0 0.0
    %1008 = vmatprep.subr.mxu0 0.0
    %1009 = vmatpush1.xpose.msra.mxu0 0.0
    %1010 = vmatprep.subr.mxu0 0.0
    %1011 = vmatpush1.xpose.msra.mxu0 0.0
    %1012 = vmatprep.subr.mxu0 0.0
    %1013 = vmatpush1.xpose.msra.mxu0 0.0
    %1014 = vmatprep.subr.mxu0 0.0
    %1015 = vmatpush1.xpose.msra.mxu0 0.0
    %1016 = vmatprep.subr.mxu0 0.0
    %1017 = vmatpush1.xpose.msra.mxu0 0.0
    %1018 = vmatprep.subr.mxu0 0.0
    %1019 = vmatpush1.xpose.msra.mxu0 0.0
    %1020 = vmatprep.subr.mxu0 0.0
    %1021 = vmatpush1.xpose.msra.mxu0 0.0
    %1022 = vmatprep.subr.mxu0 0.0
    %1023 = vmatpush1.xpose.msra.mxu0 0.0
    %1024 = vmatprep.subr.mxu0 0.0
    %1025 = vmatpush1.xpose.msra.mxu0 0.0
    %1026 = vmatprep.subr.mxu0 0.0
    %1027 = vmatpush1.xpose.msra.mxu0 0.0
    %1028 = vmatprep.subr.mxu0 0.0
    %1029 = vmatpush1.xpose.msra.mxu0 0.0
    %1030 = vmatprep.subr.mxu0 0.0
    %1031 = vmatpush1.xpose.msra.mxu0 0.0
    %1032 = vmatprep.subr.mxu0 0.0
    %1033 = vmatpush1.xpose.msra.mxu0 0.0
    %1034 = vmatprep.subr.mxu0 0.0
    %1035 = vmatpush1.xpose.msra.mxu0 0.0
    %1036 = vmatprep.subr.mxu0 0.0
    %1037 = vmatpush1.xpose.msra.mxu0 0.0
    %1038 = vmatprep.subr.mxu0 0.0
    %1039 = vmatpush1.xpose.msra.mxu0 0.0
    %1040 = vmatprep.subr.mxu0 0.0
    %1041 = vmatpush1.xpose.msra.mxu0 0.0
    %1042 = vmatprep.subr.mxu0 0.0
    %1043 = vmatpush1.xpose.msra.mxu0 0.0
    %1044 = vmatprep.subr.mxu0 0.0
    %1045 = vmatpush1.xpose.msra.mxu0 0.0
    %1046 = vmatprep.subr.mxu0 0.0
    %1047 = vmatpush1.xpose.msra.mxu0 0.0
    %1048 = vmatprep.subr.mxu0 0.0
    %1049 = vmatpush1.xpose.msra.mxu0 0.0
    %1050 = vmatprep.subr.mxu0 0.0
    %1051 = vmatpush1.xpose.msra.mxu0 0.0
    %1052 = vmatprep.subr.mxu0 0.0
    %1053 = vmatpush1.xpose.msra.mxu0 0.0
    %1054 = vmatprep.subr.mxu0 0.0
    %1055 = vmatpush1.xpose.msra.mxu0 0.0
    %1056 = vmatprep.subr.mxu0 0.0
    %1057 = vmatpush1.xpose.msra.mxu0 0.0
    %1058 = vmatprep.mubr.f32.mxu0 0.0
    %1059 = vmatmul.mubr.f32.gmra.mrb[0].mxu0 %v989
    %v1060 = vpop.f32.mrb[0].mxu0
    %v1061 = vadd.f32 0.0, %v1060
    %v1062 = vpop.f32.mrb[0].mxu0
    %1063 = vdwg.mxu0
    %v1065 = vsel %vm164, %v524, 0
    %v1068 = vsel %vm164, %v680, 0
    %1070 = vmatprep.subr.mxu0 0.0
    %1071 = vmatpush1.xpose.msra.mxu0 %v1068
    %1072 = vmatprep.subr.mxu0 0.0
    %1073 = vmatpush1.xpose.msra.mxu0 0.0
    %1074 = vmatprep.subr.mxu0 0.0
    %1075 = vmatpush1.xpose.msra.mxu0 0.0
    %1076 = vmatprep.subr.mxu0 0.0
    %1077 = vmatpush1.xpose.msra.mxu0 0.0
    %1078 = vmatprep.subr.mxu0 0.0
    %1079 = vmatpush1.xpose.msra.mxu0 0.0
    %1080 = vmatprep.subr.mxu0 0.0
    %1081 = vmatpush1.xpose.msra.mxu0 0.0
    %1082 = vmatprep.subr.mxu0 0.0
    %1083 = vmatpush1.xpose.msra.mxu0 0.0
    %1084 = vmatprep.subr.mxu0 0.0
    %1085 = vmatpush1.xpose.msra.mxu0 0.0
    %1086 = vmatprep.subr.mxu0 0.0
    %1087 = vmatpush1.xpose.msra.mxu0 0.0
    %1088 = vmatprep.subr.mxu0 0.0
    %1089 = vmatpush1.xpose.msra.mxu0 0.0
    %1090 = vmatprep.subr.mxu0 0.0
    %1091 = vmatpush1.xpose.msra.mxu0 0.0
    %1092 = vmatprep.subr.mxu0 0.0
    %1093 = vmatpush1.xpose.msra.mxu0 0.0
    %1094 = vmatprep.subr.mxu0 0.0
    %1095 = vmatpush1.xpose.msra.mxu0 0.0
    %1096 = vmatprep.subr.mxu0 0.0
    %1097 = vmatpush1.xpose.msra.mxu0 0.0
    %1098 = vmatprep.subr.mxu0 0.0
    %1099 = vmatpush1.xpose.msra.mxu0 0.0
    %1100 = vmatprep.subr.mxu0 0.0
    %1101 = vmatpush1.xpose.msra.mxu0 0.0
    %1102 = vmatprep.subr.mxu0 0.0
    %1103 = vmatpush1.xpose.msra.mxu0 0.0
    %1104 = vmatprep.subr.mxu0 0.0
    %1105 = vmatpush1.xpose.msra.mxu0 0.0
    %1106 = vmatprep.subr.mxu0 0.0
    %1107 = vmatpush1.xpose.msra.mxu0 0.0
    %1108 = vmatprep.subr.mxu0 0.0
    %1109 = vmatpush1.xpose.msra.mxu0 0.0
    %1110 = vmatprep.subr.mxu0 0.0
    %1111 = vmatpush1.xpose.msra.mxu0 0.0
    %1112 = vmatprep.subr.mxu0 0.0
    %1113 = vmatpush1.xpose.msra.mxu0 0.0
    %1114 = vmatprep.subr.mxu0 0.0
    %1115 = vmatpush1.xpose.msra.mxu0 0.0
    %1116 = vmatprep.subr.mxu0 0.0
    %1117 = vmatpush1.xpose.msra.mxu0 0.0
    %1118 = vmatprep.subr.mxu0 0.0
    %1119 = vmatpush1.xpose.msra.mxu0 0.0
    %1120 = vmatprep.subr.mxu0 0.0
    %1121 = vmatpush1.xpose.msra.mxu0 0.0
    %1122 = vmatprep.subr.mxu0 0.0
    %1123 = vmatpush1.xpose.msra.mxu0 0.0
    %1124 = vmatprep.subr.mxu0 0.0
    %1125 = vmatpush1.xpose.msra.mxu0 0.0
    %1126 = vmatprep.subr.mxu0 0.0
    %1127 = vmatpush1.xpose.msra.mxu0 0.0
    %1128 = vmatprep.subr.mxu0 0.0
    %1129 = vmatpush1.xpose.msra.mxu0 0.0
    %1130 = vmatprep.subr.mxu0 0.0
    %1131 = vmatpush1.xpose.msra.mxu0 0.0
    %1132 = vmatprep.subr.mxu0 0.0
    %1133 = vmatpush1.xpose.msra.mxu0 0.0
    %1134 = vmatprep.mubr.f32.mxu0 0.0
    %1135 = vmatmul.mubr.f32.gmra.mrb[0].mxu0 %v1065
    %v1136 = vpop.f32.mrb[0].mxu0
    %v1137 = vadd.f32 0.0, %v1136
    %v1138 = vpop.f32.mrb[0].mxu0
    %1139 = vdwg.mxu0
    %v1141 = vsel %vm164, %v534, 0
    %v1144 = vsel %vm164, %v690, 0
    %1146 = vmatprep.subr.mxu0 0.0
    %1147 = vmatpush1.xpose.msra.mxu0 %v1144
    %1148 = vmatprep.subr.mxu0 0.0
    %1149 = vmatpush1.xpose.msra.mxu0 0.0
    %1150 = vmatprep.subr.mxu0 0.0
    %1151 = vmatpush1.xpose.msra.mxu0 0.0
    %1152 = vmatprep.subr.mxu0 0.0
    %1153 = vmatpush1.xpose.msra.mxu0 0.0
    %1154 = vmatprep.subr.mxu0 0.0
    %1155 = vmatpush1.xpose.msra.mxu0 0.0
    %1156 = vmatprep.subr.mxu0 0.0
    %1157 = vmatpush1.xpose.msra.mxu0 0.0
    %1158 = vmatprep.subr.mxu0 0.0
    %1159 = vmatpush1.xpose.msra.mxu0 0.0
    %1160 = vmatprep.subr.mxu0 0.0
    %1161 = vmatpush1.xpose.msra.mxu0 0.0
    %1162 = vmatprep.subr.mxu0 0.0
    %1163 = vmatpush1.xpose.msra.mxu0 0.0
    %1164 = vmatprep.subr.mxu0 0.0
    %1165 = vmatpush1.xpose.msra.mxu0 0.0
    %1166 = vmatprep.subr.mxu0 0.0
    %1167 = vmatpush1.xpose.msra.mxu0 0.0
    %1168 = vmatprep.subr.mxu0 0.0
    %1169 = vmatpush1.xpose.msra.mxu0 0.0
    %1170 = vmatprep.subr.mxu0 0.0
    %1171 = vmatpush1.xpose.msra.mxu0 0.0
    %1172 = vmatprep.subr.mxu0 0.0
    %1173 = vmatpush1.xpose.msra.mxu0 0.0
    %1174 = vmatprep.subr.mxu0 0.0
    %1175 = vmatpush1.xpose.msra.mxu0 0.0
    %1176 = vmatprep.subr.mxu0 0.0
    %1177 = vmatpush1.xpose.msra.mxu0 0.0
    %1178 = vmatprep.subr.mxu0 0.0
    %1179 = vmatpush1.xpose.msra.mxu0 0.0
    %1180 = vmatprep.subr.mxu0 0.0
    %1181 = vmatpush1.xpose.msra.mxu0 0.0
    %1182 = vmatprep.subr.mxu0 0.0
    %1183 = vmatpush1.xpose.msra.mxu0 0.0
    %1184 = vmatprep.subr.mxu0 0.0
    %1185 = vmatpush1.xpose.msra.mxu0 0.0
    %1186 = vmatprep.subr.mxu0 0.0
    %1187 = vmatpush1.xpose.msra.mxu0 0.0
    %1188 = vmatprep.subr.mxu0 0.0
    %1189 = vmatpush1.xpose.msra.mxu0 0.0
    %1190 = vmatprep.subr.mxu0 0.0
    %1191 = vmatpush1.xpose.msra.mxu0 0.0
    %1192 = vmatprep.subr.mxu0 0.0
    %1193 = vmatpush1.xpose.msra.mxu0 0.0
    %1194 = vmatprep.subr.mxu0 0.0
    %1195 = vmatpush1.xpose.msra.mxu0 0.0
    %1196 = vmatprep.subr.mxu0 0.0
    %1197 = vmatpush1.xpose.msra.mxu0 0.0
    %1198 = vmatprep.subr.mxu0 0.0
    %1199 = vmatpush1.xpose.msra.mxu0 0.0
    %1200 = vmatprep.subr.mxu0 0.0
    %1201 = vmatpush1.xpose.msra.mxu0 0.0
    %1202 = vmatprep.subr.mxu0 0.0
    %1203 = vmatpush1.xpose.msra.mxu0 0.0
    %1204 = vmatprep.subr.mxu0 0.0
    %1205 = vmatpush1.xpose.msra.mxu0 0.0
    %1206 = vmatprep.subr.mxu0 0.0
    %1207 = vmatpush1.xpose.msra.mxu0 0.0
    %1208 = vmatprep.subr.mxu0 0.0
    %1209 = vmatpush1.xpose.msra.mxu0 0.0
    %1210 = vmatprep.mubr.f32.mxu0 0.0
    %1211 = vmatmul.mubr.f32.gmra.mrb[0].mxu0 %v1141
    %v1212 = vpop.f32.mrb[0].mxu0
    %v1213 = vadd.f32 0.0, %v1212
    %v1214 = vpop.f32.mrb[0].mxu0
    %1215 = vdwg.mxu0
    %v1217 = vsel %vm164, %v531, 0
    %v1220 = vsel %vm164, %v687, 0
    %1222 = vmatprep.subr.mxu0 0.0
    %1223 = vmatpush1.xpose.msra.mxu0 %v1220
    %1224 = vmatprep.subr.mxu0 0.0
    %1225 = vmatpush1.xpose.msra.mxu0 0.0
    %1226 = vmatprep.subr.mxu0 0.0
    %1227 = vmatpush1.xpose.msra.mxu0 0.0
    %1228 = vmatprep.subr.mxu0 0.0
    %1229 = vmatpush1.xpose.msra.mxu0 0.0
    %1230 = vmatprep.subr.mxu0 0.0
    %1231 = vmatpush1.xpose.msra.mxu0 0.0
    %1232 = vmatprep.subr.mxu0 0.0
    %1233 = vmatpush1.xpose.msra.mxu0 0.0
    %1234 = vmatprep.subr.mxu0 0.0
    %1235 = vmatpush1.xpose.msra.mxu0 0.0
    %1236 = vmatprep.subr.mxu0 0.0
    %1237 = vmatpush1.xpose.msra.mxu0 0.0
    %1238 = vmatprep.subr.mxu0 0.0
    %1239 = vmatpush1.xpose.msra.mxu0 0.0
    %1240 = vmatprep.subr.mxu0 0.0
    %1241 = vmatpush1.xpose.msra.mxu0 0.0
    %1242 = vmatprep.subr.mxu0 0.0
    %1243 = vmatpush1.xpose.msra.mxu0 0.0
    %1244 = vmatprep.subr.mxu0 0.0
    %1245 = vmatpush1.xpose.msra.mxu0 0.0
    %1246 = vmatprep.subr.mxu0 0.0
    %1247 = vmatpush1.xpose.msra.mxu0 0.0
    %1248 = vmatprep.subr.mxu0 0.0
    %1249 = vmatpush1.xpose.msra.mxu0 0.0
    %1250 = vmatprep.subr.mxu0 0.0
    %1251 = vmatpush1.xpose.msra.mxu0 0.0
    %1252 = vmatprep.subr.mxu0 0.0
    %1253 = vmatpush1.xpose.msra.mxu0 0.0
    %1254 = vmatprep.subr.mxu0 0.0
    %1255 = vmatpush1.xpose.msra.mxu0 0.0
    %1256 = vmatprep.subr.mxu0 0.0
    %1257 = vmatpush1.xpose.msra.mxu0 0.0
    %1258 = vmatprep.subr.mxu0 0.0
    %1259 = vmatpush1.xpose.msra.mxu0 0.0
    %1260 = vmatprep.subr.mxu0 0.0
    %1261 = vmatpush1.xpose.msra.mxu0 0.0
    %1262 = vmatprep.subr.mxu0 0.0
    %1263 = vmatpush1.xpose.msra.mxu0 0.0
    %1264 = vmatprep.subr.mxu0 0.0
    %1265 = vmatpush1.xpose.msra.mxu0 0.0
    %1266 = vmatprep.subr.mxu0 0.0
    %1267 = vmatpush1.xpose.msra.mxu0 0.0
    %1268 = vmatprep.subr.mxu0 0.0
    %1269 = vmatpush1.xpose.msra.mxu0 0.0
    %1270 = vmatprep.subr.mxu0 0.0
    %1271 = vmatpush1.xpose.msra.mxu0 0.0
    %1272 = vmatprep.subr.mxu0 0.0
    %1273 = vmatpush1.xpose.msra.mxu0 0.0
    %1274 = vmatprep.subr.mxu0 0.0
    %1275 = vmatpush1.xpose.msra.mxu0 0.0
    %1276 = vmatprep.subr.mxu0 0.0
    %1277 = vmatpush1.xpose.msra.mxu0 0.0
    %1278 = vmatprep.subr.mxu0 0.0
    %1279 = vmatpush1.xpose.msra.mxu0 0.0
    %1280 = vmatprep.subr.mxu0 0.0
    %1281 = vmatpush1.xpose.msra.mxu0 0.0
    %1282 = vmatprep.subr.mxu0 0.0
    %1283 = vmatpush1.xpose.msra.mxu0 0.0
    %1284 = vmatprep.subr.mxu0 0.0
    %1285 = vmatpush1.xpose.msra.mxu0 0.0
    %1286 = vmatprep.mubr.f32.mxu0 0.0
    %1287 = vmatmul.mubr.f32.gmra.mrb[0].mxu0 %v1217
    %v1288 = vpop.f32.mrb[0].mxu0
    %v1289 = vadd.f32 0.0, %v1288
    %v1290 = vpop.f32.mrb[0].mxu0
    %1291 = vdwg.mxu0
    %v1293 = vsel %vm164, %v535, 0
    %v1296 = vsel %vm164, %v691, 0
    %1298 = vmatprep.subr.mxu0 0.0
    %1299 = vmatpush1.xpose.msra.mxu0 %v1296
    %1300 = vmatprep.subr.mxu0 0.0
    %1301 = vmatpush1.xpose.msra.mxu0 0.0
    %1302 = vmatprep.subr.mxu0 0.0
    %1303 = vmatpush1.xpose.msra.mxu0 0.0
    %1304 = vmatprep.subr.mxu0 0.0
    %1305 = vmatpush1.xpose.msra.mxu0 0.0
    %1306 = vmatprep.subr.mxu0 0.0
    %1307 = vmatpush1.xpose.msra.mxu0 0.0
    %1308 = vmatprep.subr.mxu0 0.0
    %1309 = vmatpush1.xpose.msra.mxu0 0.0
    %1310 = vmatprep.subr.mxu0 0.0
    %1311 = vmatpush1.xpose.msra.mxu0 0.0
    %1312 = vmatprep.subr.mxu0 0.0
    %1313 = vmatpush1.xpose.msra.mxu0 0.0
    %1314 = vmatprep.subr.mxu0 0.0
    %1315 = vmatpush1.xpose.msra.mxu0 0.0
    %1316 = vmatprep.subr.mxu0 0.0
    %1317 = vmatpush1.xpose.msra.mxu0 0.0
    %1318 = vmatprep.subr.mxu0 0.0
    %1319 = vmatpush1.xpose.msra.mxu0 0.0
    %1320 = vmatprep.subr.mxu0 0.0
    %1321 = vmatpush1.xpose.msra.mxu0 0.0
    %1322 = vmatprep.subr.mxu0 0.0
    %1323 = vmatpush1.xpose.msra.mxu0 0.0
    %1324 = vmatprep.subr.mxu0 0.0
    %1325 = vmatpush1.xpose.msra.mxu0 0.0
    %1326 = vmatprep.subr.mxu0 0.0
    %1327 = vmatpush1.xpose.msra.mxu0 0.0
    %1328 = vmatprep.subr.mxu0 0.0
    %1329 = vmatpush1.xpose.msra.mxu0 0.0
    %1330 = vmatprep.subr.mxu0 0.0
    %1331 = vmatpush1.xpose.msra.mxu0 0.0
    %1332 = vmatprep.subr.mxu0 0.0
    %1333 = vmatpush1.xpose.msra.mxu0 0.0
    %1334 = vmatprep.subr.mxu0 0.0
    %1335 = vmatpush1.xpose.msra.mxu0 0.0
    %1336 = vmatprep.subr.mxu0 0.0
    %1337 = vmatpush1.xpose.msra.mxu0 0.0
    %1338 = vmatprep.subr.mxu0 0.0
    %1339 = vmatpush1.xpose.msra.mxu0 0.0
    %1340 = vmatprep.subr.mxu0 0.0
    %1341 = vmatpush1.xpose.msra.mxu0 0.0
    %1342 = vmatprep.subr.mxu0 0.0
    %1343 = vmatpush1.xpose.msra.mxu0 0.0
    %1344 = vmatprep.subr.mxu0 0.0
    %1345 = vmatpush1.xpose.msra.mxu0 0.0
    %1346 = vmatprep.subr.mxu0 0.0
    %1347 = vmatpush1.xpose.msra.mxu0 0.0
    %1348 = vmatprep.subr.mxu0 0.0
    %1349 = vmatpush1.xpose.msra.mxu0 0.0
    %1350 = vmatprep.subr.mxu0 0.0
    %1351 = vmatpush1.xpose.msra.mxu0 0.0
    %1352 = vmatprep.subr.mxu0 0.0
    %1353 = vmatpush1.xpose.msra.mxu0 0.0
    %1354 = vmatprep.subr.mxu0 0.0
    %1355 = vmatpush1.xpose.msra.mxu0 0.0
    %1356 = vmatprep.subr.mxu0 0.0
    %1357 = vmatpush1.xpose.msra.mxu0 0.0
    %1358 = vmatprep.subr.mxu0 0.0
    %1359 = vmatpush1.xpose.msra.mxu0 0.0
    %1360 = vmatprep.subr.mxu0 0.0
    %1361 = vmatpush1.xpose.msra.mxu0 0.0
    %1362 = vmatprep.mubr.f32.mxu0 0.0
    %1363 = vmatmul.mubr.f32.gmra.mrb[0].mxu0 %v1293
    %v1364 = vpop.f32.mrb[0].mxu0
    %v1365 = vadd.f32 0.0, %v1364
    %v1366 = vpop.f32.mrb[0].mxu0
    %1367 = vdwg.mxu0
    %v1369 = vsel %vm164, %v576, 0
    %v1372 = vsel %vm164, %v732, 0
    %1374 = vmatprep.subr.mxu0 0.0
    %1375 = vmatpush1.xpose.msra.mxu0 %v1372
    %1376 = vmatprep.subr.mxu0 0.0
    %1377 = vmatpush1.xpose.msra.mxu0 0.0
    %1378 = vmatprep.subr.mxu0 0.0
    %1379 = vmatpush1.xpose.msra.mxu0 0.0
    %1380 = vmatprep.subr.mxu0 0.0
    %1381 = vmatpush1.xpose.msra.mxu0 0.0
    %1382 = vmatprep.subr.mxu0 0.0
    %1383 = vmatpush1.xpose.msra.mxu0 0.0
    %1384 = vmatprep.subr.mxu0 0.0
    %1385 = vmatpush1.xpose.msra.mxu0 0.0
    %1386 = vmatprep.subr.mxu0 0.0
    %1387 = vmatpush1.xpose.msra.mxu0 0.0
    %1388 = vmatprep.subr.mxu0 0.0
    %1389 = vmatpush1.xpose.msra.mxu0 0.0
    %1390 = vmatprep.subr.mxu0 0.0
    %1391 = vmatpush1.xpose.msra.mxu0 0.0
    %1392 = vmatprep.subr.mxu0 0.0
    %1393 = vmatpush1.xpose.msra.mxu0 0.0
    %1394 = vmatprep.subr.mxu0 0.0
    %1395 = vmatpush1.xpose.msra.mxu0 0.0
    %1396 = vmatprep.subr.mxu0 0.0
    %1397 = vmatpush1.xpose.msra.mxu0 0.0
    %1398 = vmatprep.subr.mxu0 0.0
    %1399 = vmatpush1.xpose.msra.mxu0 0.0
    %1400 = vmatprep.subr.mxu0 0.0
    %1401 = vmatpush1.xpose.msra.mxu0 0.0
    %1402 = vmatprep.subr.mxu0 0.0
    %1403 = vmatpush1.xpose.msra.mxu0 0.0
    %1404 = vmatprep.subr.mxu0 0.0
    %1405 = vmatpush1.xpose.msra.mxu0 0.0
    %1406 = vmatprep.subr.mxu0 0.0
    %1407 = vmatpush1.xpose.msra.mxu0 0.0
    %1408 = vmatprep.subr.mxu0 0.0
    %1409 = vmatpush1.xpose.msra.mxu0 0.0
    %1410 = vmatprep.subr.mxu0 0.0
    %1411 = vmatpush1.xpose.msra.mxu0 0.0
    %1412 = vmatprep.subr.mxu0 0.0
    %1413 = vmatpush1.xpose.msra.mxu0 0.0
    %1414 = vmatprep.subr.mxu0 0.0
    %1415 = vmatpush1.xpose.msra.mxu0 0.0
    %1416 = vmatprep.subr.mxu0 0.0
    %1417 = vmatpush1.xpose.msra.mxu0 0.0
    %1418 = vmatprep.subr.mxu0 0.0
    %1419 = vmatpush1.xpose.msra.mxu0 0.0
    %1420 = vmatprep.subr.mxu0 0.0
    %1421 = vmatpush1.xpose.msra.mxu0 0.0
    %1422 = vmatprep.subr.mxu0 0.0
    %1423 = vmatpush1.xpose.msra.mxu0 0.0
    %1424 = vmatprep.subr.mxu0 0.0
    %1425 = vmatpush1.xpose.msra.mxu0 0.0
    %1426 = vmatprep.subr.mxu0 0.0
    %1427 = vmatpush1.xpose.msra.mxu0 0.0
    %1428 = vmatprep.subr.mxu0 0.0
    %1429 = vmatpush1.xpose.msra.mxu0 0.0
    %1430 = vmatprep.subr.mxu0 0.0
    %1431 = vmatpush1.xpose.msra.mxu0 0.0
    %1432 = vmatprep.subr.mxu0 0.0
    %1433 = vmatpush1.xpose.msra.mxu0 0.0
    %1434 = vmatprep.subr.mxu0 0.0
    %1435 = vmatpush1.xpose.msra.mxu0 0.0
    %1436 = vmatprep.subr.mxu0 0.0
    %1437 = vmatpush1.xpose.msra.mxu0 0.0
    %1438 = vmatprep.mubr.f32.mxu0 0.0
    %1439 = vmatmul.mubr.f32.gmra.mrb[0].mxu0 %v1369
    %v1440 = vpop.f32.mrb[0].mxu0
    %v1441 = vadd.f32 0.0, %v1440
    %v1442 = vpop.f32.mrb[0].mxu0
    %1443 = vdwg.mxu0
    %v1445 = vsel %vm164, %v600, 0
    %v1448 = vsel %vm164, %v756, 0
    %1450 = vmatprep.subr.mxu0 0.0
    %1451 = vmatpush1.xpose.msra.mxu0 %v1448
    %1452 = vmatprep.subr.mxu0 0.0
    %1453 = vmatpush1.xpose.msra.mxu0 0.0
    %1454 = vmatprep.subr.mxu0 0.0
    %1455 = vmatpush1.xpose.msra.mxu0 0.0
    %1456 = vmatprep.subr.mxu0 0.0
    %1457 = vmatpush1.xpose.msra.mxu0 0.0
    %1458 = vmatprep.subr.mxu0 0.0
    %1459 = vmatpush1.xpose.msra.mxu0 0.0
    %1460 = vmatprep.subr.mxu0 0.0
    %1461 = vmatpush1.xpose.msra.mxu0 0.0
    %1462 = vmatprep.subr.mxu0 0.0
    %1463 = vmatpush1.xpose.msra.mxu0 0.0
    %1464 = vmatprep.subr.mxu0 0.0
    %1465 = vmatpush1.xpose.msra.mxu0 0.0
    %1466 = vmatprep.subr.mxu0 0.0
    %1467 = vmatpush1.xpose.msra.mxu0 0.0
    %1468 = vmatprep.subr.mxu0 0.0
    %1469 = vmatpush1.xpose.msra.mxu0 0.0
    %1470 = vmatprep.subr.mxu0 0.0
    %1471 = vmatpush1.xpose.msra.mxu0 0.0
    %1472 = vmatprep.subr.mxu0 0.0
    %1473 = vmatpush1.xpose.msra.mxu0 0.0
    %1474 = vmatprep.subr.mxu0 0.0
    %1475 = vmatpush1.xpose.msra.mxu0 0.0
    %1476 = vmatprep.subr.mxu0 0.0
    %1477 = vmatpush1.xpose.msra.mxu0 0.0
    %1478 = vmatprep.subr.mxu0 0.0
    %1479 = vmatpush1.xpose.msra.mxu0 0.0
    %1480 = vmatprep.subr.mxu0 0.0
    %1481 = vmatpush1.xpose.msra.mxu0 0.0
    %1482 = vmatprep.subr.mxu0 0.0
    %1483 = vmatpush1.xpose.msra.mxu0 0.0
    %1484 = vmatprep.subr.mxu0 0.0
    %1485 = vmatpush1.xpose.msra.mxu0 0.0
    %1486 = vmatprep.subr.mxu0 0.0
    %1487 = vmatpush1.xpose.msra.mxu0 0.0
    %1488 = vmatprep.subr.mxu0 0.0
    %1489 = vmatpush1.xpose.msra.mxu0 0.0
    %1490 = vmatprep.subr.mxu0 0.0
    %1491 = vmatpush1.xpose.msra.mxu0 0.0
    %1492 = vmatprep.subr.mxu0 0.0
    %1493 = vmatpush1.xpose.msra.mxu0 0.0
    %1494 = vmatprep.subr.mxu0 0.0
    %1495 = vmatpush1.xpose.msra.mxu0 0.0
    %1496 = vmatprep.subr.mxu0 0.0
    %1497 = vmatpush1.xpose.msra.mxu0 0.0
    %1498 = vmatprep.subr.mxu0 0.0
    %1499 = vmatpush1.xpose.msra.mxu0 0.0
    %1500 = vmatprep.subr.mxu0 0.0
    %1501 = vmatpush1.xpose.msra.mxu0 0.0
    %1502 = vmatprep.subr.mxu0 0.0
    %1503 = vmatpush1.xpose.msra.mxu0 0.0
    %1504 = vmatprep.subr.mxu0 0.0
    %1505 = vmatpush1.xpose.msra.mxu0 0.0
    %1506 = vmatprep.subr.mxu0 0.0
    %1507 = vmatpush1.xpose.msra.mxu0 0.0
    %1508 = vmatprep.subr.mxu0 0.0
    %1509 = vmatpush1.xpose.msra.mxu0 0.0
    %1510 = vmatprep.subr.mxu0 0.0
    %1511 = vmatpush1.xpose.msra.mxu0 0.0
    %1512 = vmatprep.subr.mxu0 0.0
    %1513 = vmatpush1.xpose.msra.mxu0 0.0
    %1514 = vmatprep.mubr.f32.mxu0 0.0
    %1515 = vmatmul.mubr.f32.gmra.mrb[0].mxu0 %v1445
    %v1516 = vpop.f32.mrb[0].mxu0
    %v1517 = vadd.f32 0.0, %v1516
    %v1518 = vpop.f32.mrb[0].mxu0
    %1519 = vdwg.mxu0
    %v1521 = vsel %vm164, %v583, 0
    %v1524 = vsel %vm164, %v739, 0
    %1526 = vmatprep.subr.mxu0 0.0
    %1527 = vmatpush1.xpose.msra.mxu0 %v1524
    %1528 = vmatprep.subr.mxu0 0.0
    %1529 = vmatpush1.xpose.msra.mxu0 0.0
    %1530 = vmatprep.subr.mxu0 0.0
    %1531 = vmatpush1.xpose.msra.mxu0 0.0
    %1532 = vmatprep.subr.mxu0 0.0
    %1533 = vmatpush1.xpose.msra.mxu0 0.0
    %1534 = vmatprep.subr.mxu0 0.0
    %1535 = vmatpush1.xpose.msra.mxu0 0.0
    %1536 = vmatprep.subr.mxu0 0.0
    %1537 = vmatpush1.xpose.msra.mxu0 0.0
    %1538 = vmatprep.subr.mxu0 0.0
    %1539 = vmatpush1.xpose.msra.mxu0 0.0
    %1540 = vmatprep.subr.mxu0 0.0
    %1541 = vmatpush1.xpose.msra.mxu0 0.0
    %1542 = vmatprep.subr.mxu0 0.0
    %1543 = vmatpush1.xpose.msra.mxu0 0.0
    %1544 = vmatprep.subr.mxu0 0.0
    %1545 = vmatpush1.xpose.msra.mxu0 0.0
    %1546 = vmatprep.subr.mxu0 0.0
    %1547 = vmatpush1.xpose.msra.mxu0 0.0
    %1548 = vmatprep.subr.mxu0 0.0
    %1549 = vmatpush1.xpose.msra.mxu0 0.0
    %1550 = vmatprep.subr.mxu0 0.0
    %1551 = vmatpush1.xpose.msra.mxu0 0.0
    %1552 = vmatprep.subr.mxu0 0.0
    %1553 = vmatpush1.xpose.msra.mxu0 0.0
    %1554 = vmatprep.subr.mxu0 0.0
    %1555 = vmatpush1.xpose.msra.mxu0 0.0
    %1556 = vmatprep.subr.mxu0 0.0
    %1557 = vmatpush1.xpose.msra.mxu0 0.0
    %1558 = vmatprep.subr.mxu0 0.0
    %1559 = vmatpush1.xpose.msra.mxu0 0.0
    %1560 = vmatprep.subr.mxu0 0.0
    %1561 = vmatpush1.xpose.msra.mxu0 0.0
    %1562 = vmatprep.subr.mxu0 0.0
    %1563 = vmatpush1.xpose.msra.mxu0 0.0
    %1564 = vmatprep.subr.mxu0 0.0
    %1565 = vmatpush1.xpose.msra.mxu0 0.0
    %1566 = vmatprep.subr.mxu0 0.0
    %1567 = vmatpush1.xpose.msra.mxu0 0.0
    %1568 = vmatprep.subr.mxu0 0.0
    %1569 = vmatpush1.xpose.msra.mxu0 0.0
    %1570 = vmatprep.subr.mxu0 0.0
    %1571 = vmatpush1.xpose.msra.mxu0 0.0
    %1572 = vmatprep.subr.mxu0 0.0
    %1573 = vmatpush1.xpose.msra.mxu0 0.0
    %1574 = vmatprep.subr.mxu0 0.0
    %1575 = vmatpush1.xpose.msra.mxu0 0.0
    %1576 = vmatprep.subr.mxu0 0.0
    %1577 = vmatpush1.xpose.msra.mxu0 0.0
    %1578 = vmatprep.subr.mxu0 0.0
    %1579 = vmatpush1.xpose.msra.mxu0 0.0
    %1580 = vmatprep.subr.mxu0 0.0
    %1581 = vmatpush1.xpose.msra.mxu0 0.0
    %1582 = vmatprep.subr.mxu0 0.0
    %1583 = vmatpush1.xpose.msra.mxu0 0.0
    %1584 = vmatprep.subr.mxu0 0.0
    %1585 = vmatpush1.xpose.msra.mxu0 0.0
    %1586 = vmatprep.subr.mxu0 0.0
    %1587 = vmatpush1.xpose.msra.mxu0 0.0
    %1588 = vmatprep.subr.mxu0 0.0
    %1589 = vmatpush1.xpose.msra.mxu0 0.0
    %1590 = vmatprep.mubr.f32.mxu0 0.0
    %1591 = vmatmul.mubr.f32.gmra.mrb[0].mxu0 %v1521
    %v1592 = vpop.f32.mrb[0].mxu0
    %v1593 = vadd.f32 0.0, %v1592
    %v1594 = vpop.f32.mrb[0].mxu0
    %1595 = vdwg.mxu0
    %v1597 = vsel %vm164, %v601, 0
    %v1600 = vsel %vm164, %v757, 0
    %1602 = vmatprep.subr.mxu0 0.0
    %1603 = vmatpush1.xpose.msra.mxu0 %v1600
    %1604 = vmatprep.subr.mxu0 0.0
    %1605 = vmatpush1.xpose.msra.mxu0 0.0
    %1606 = vmatprep.subr.mxu0 0.0
    %1607 = vmatpush1.xpose.msra.mxu0 0.0
    %1608 = vmatprep.subr.mxu0 0.0
    %1609 = vmatpush1.xpose.msra.mxu0 0.0
    %1610 = vmatprep.subr.mxu0 0.0
    %1611 = vmatpush1.xpose.msra.mxu0 0.0
    %1612 = vmatprep.subr.mxu0 0.0
    %1613 = vmatpush1.xpose.msra.mxu0 0.0
    %1614 = vmatprep.subr.mxu0 0.0
    %1615 = vmatpush1.xpose.msra.mxu0 0.0
    %1616 = vmatprep.subr.mxu0 0.0
    %1617 = vmatpush1.xpose.msra.mxu0 0.0
    %1618 = vmatprep.subr.mxu0 0.0
    %1619 = vmatpush1.xpose.msra.mxu0 0.0
    %1620 = vmatprep.subr.mxu0 0.0
    %1621 = vmatpush1.xpose.msra.mxu0 0.0
    %1622 = vmatprep.subr.mxu0 0.0
    %1623 = vmatpush1.xpose.msra.mxu0 0.0
    %1624 = vmatprep.subr.mxu0 0.0
    %1625 = vmatpush1.xpose.msra.mxu0 0.0
    %1626 = vmatprep.subr.mxu0 0.0
    %1627 = vmatpush1.xpose.msra.mxu0 0.0
    %1628 = vmatprep.subr.mxu0 0.0
    %1629 = vmatpush1.xpose.msra.mxu0 0.0
    %1630 = vmatprep.subr.mxu0 0.0
    %1631 = vmatpush1.xpose.msra.mxu0 0.0
    %1632 = vmatprep.subr.mxu0 0.0
    %1633 = vmatpush1.xpose.msra.mxu0 0.0
    %1634 = vmatprep.subr.mxu0 0.0
    %1635 = vmatpush1.xpose.msra.mxu0 0.0
    %1636 = vmatprep.subr.mxu0 0.0
    %1637 = vmatpush1.xpose.msra.mxu0 0.0
    %1638 = vmatprep.subr.mxu0 0.0
    %1639 = vmatpush1.xpose.msra.mxu0 0.0
    %1640 = vmatprep.subr.mxu0 0.0
    %1641 = vmatpush1.xpose.msra.mxu0 0.0
    %1642 = vmatprep.subr.mxu0 0.0
    %1643 = vmatpush1.xpose.msra.mxu0 0.0
    %1644 = vmatprep.subr.mxu0 0.0
    %1645 = vmatpush1.xpose.msra.mxu0 0.0
    %1646 = vmatprep.subr.mxu0 0.0
    %1647 = vmatpush1.xpose.msra.mxu0 0.0
    %1648 = vmatprep.subr.mxu0 0.0
    %1649 = vmatpush1.xpose.msra.mxu0 0.0
    %1650 = vmatprep.subr.mxu0 0.0
    %1651 = vmatpush1.xpose.msra.mxu0 0.0
    %1652 = vmatprep.subr.mxu0 0.0
    %1653 = vmatpush1.xpose.msra.mxu0 0.0
    %1654 = vmatprep.subr.mxu0 0.0
    %1655 = vmatpush1.xpose.msra.mxu0 0.0
    %1656 = vmatprep.subr.mxu0 0.0
    %1657 = vmatpush1.xpose.msra.mxu0 0.0
    %1658 = vmatprep.subr.mxu0 0.0
    %1659 = vmatpush1.xpose.msra.mxu0 0.0
    %1660 = vmatprep.subr.mxu0 0.0
    %1661 = vmatpush1.xpose.msra.mxu0 0.0
    %1662 = vmatprep.subr.mxu0 0.0
    %1663 = vmatpush1.xpose.msra.mxu0 0.0
    %1664 = vmatprep.subr.mxu0 0.0
    %1665 = vmatpush1.xpose.msra.mxu0 0.0
    %1666 = vmatprep.mubr.f32.mxu0 0.0
    %1667 = vmatmul.mubr.f32.gmra.mrb[0].mxu0 %v1597
    %v1668 = vpop.f32.mrb[0].mxu0
    %v1669 = vadd.f32 0.0, %v1668
    %v1670 = vpop.f32.mrb[0].mxu0
    %1671 = vdwg.mxu0
    %v1673 = vsel %vm164, %v592, 0
    %v1676 = vsel %vm164, %v748, 0
    %1678 = vmatprep.subr.mxu0 0.0
    %1679 = vmatpush1.xpose.msra.mxu0 %v1676
    %1680 = vmatprep.subr.mxu0 0.0
    %1681 = vmatpush1.xpose.msra.mxu0 0.0
    %1682 = vmatprep.subr.mxu0 0.0
    %1683 = vmatpush1.xpose.msra.mxu0 0.0
    %1684 = vmatprep.subr.mxu0 0.0
    %1685 = vmatpush1.xpose.msra.mxu0 0.0
    %1686 = vmatprep.subr.mxu0 0.0
    %1687 = vmatpush1.xpose.msra.mxu0 0.0
    %1688 = vmatprep.subr.mxu0 0.0
    %1689 = vmatpush1.xpose.msra.mxu0 0.0
    %1690 = vmatprep.subr.mxu0 0.0
    %1691 = vmatpush1.xpose.msra.mxu0 0.0
    %1692 = vmatprep.subr.mxu0 0.0
    %1693 = vmatpush1.xpose.msra.mxu0 0.0
    %1694 = vmatprep.subr.mxu0 0.0
    %1695 = vmatpush1.xpose.msra.mxu0 0.0
    %1696 = vmatprep.subr.mxu0 0.0
    %1697 = vmatpush1.xpose.msra.mxu0 0.0
    %1698 = vmatprep.subr.mxu0 0.0
    %1699 = vmatpush1.xpose.msra.mxu0 0.0
    %1700 = vmatprep.subr.mxu0 0.0
    %1701 = vmatpush1.xpose.msra.mxu0 0.0
    %1702 = vmatprep.subr.mxu0 0.0
    %1703 = vmatpush1.xpose.msra.mxu0 0.0
    %1704 = vmatprep.subr.mxu0 0.0
    %1705 = vmatpush1.xpose.msra.mxu0 0.0
    %1706 = vmatprep.subr.mxu0 0.0
    %1707 = vmatpush1.xpose.msra.mxu0 0.0
    %1708 = vmatprep.subr.mxu0 0.0
    %1709 = vmatpush1.xpose.msra.mxu0 0.0
    %1710 = vmatprep.subr.mxu0 0.0
    %1711 = vmatpush1.xpose.msra.mxu0 0.0
    %1712 = vmatprep.subr.mxu0 0.0
    %1713 = vmatpush1.xpose.msra.mxu0 0.0
    %1714 = vmatprep.subr.mxu0 0.0
    %1715 = vmatpush1.xpose.msra.mxu0 0.0
    %1716 = vmatprep.subr.mxu0 0.0
    %1717 = vmatpush1.xpose.msra.mxu0 0.0
    %1718 = vmatprep.subr.mxu0 0.0
    %1719 = vmatpush1.xpose.msra.mxu0 0.0
    %1720 = vmatprep.subr.mxu0 0.0
    %1721 = vmatpush1.xpose.msra.mxu0 0.0
    %1722 = vmatprep.subr.mxu0 0.0
    %1723 = vmatpush1.xpose.msra.mxu0 0.0
    %1724 = vmatprep.subr.mxu0 0.0
    %1725 = vmatpush1.xpose.msra.mxu0 0.0
    %1726 = vmatprep.subr.mxu0 0.0
    %1727 = vmatpush1.xpose.msra.mxu0 0.0
    %1728 = vmatprep.subr.mxu0 0.0
    %1729 = vmatpush1.xpose.msra.mxu0 0.0
    %1730 = vmatprep.subr.mxu0 0.0
    %1731 = vmatpush1.xpose.msra.mxu0 0.0
    %1732 = vmatprep.subr.mxu0 0.0
    %1733 = vmatpush1.xpose.msra.mxu0 0.0
    %1734 = vmatprep.subr.mxu0 0.0
    %1735 = vmatpush1.xpose.msra.mxu0 0.0
    %1736 = vmatprep.subr.mxu0 0.0
    %1737 = vmatpush1.xpose.msra.mxu0 0.0
    %1738 = vmatprep.subr.mxu0 0.0
    %1739 = vmatpush1.xpose.msra.mxu0 0.0
    %1740 = vmatprep.subr.mxu0 0.0
    %1741 = vmatpush1.xpose.msra.mxu0 0.0
    %1742 = vmatprep.mubr.f32.mxu0 0.0
    %1743 = vmatmul.mubr.f32.gmra.mrb[0].mxu0 %v1673
    %v1744 = vpop.f32.mrb[0].mxu0
    %v1745 = vadd.f32 0.0, %v1744
    %v1746 = vpop.f32.mrb[0].mxu0
    %1747 = vdwg.mxu0
    %v1749 = vsel %vm164, %v602, 0
    %v1752 = vsel %vm164, %v758, 0
    %1754 = vmatprep.subr.mxu0 0.0
    %1755 = vmatpush1.xpose.msra.mxu0 %v1752
    %1756 = vmatprep.subr.mxu0 0.0
    %1757 = vmatpush1.xpose.msra.mxu0 0.0
    %1758 = vmatprep.subr.mxu0 0.0
    %1759 = vmatpush1.xpose.msra.mxu0 0.0
    %1760 = vmatprep.subr.mxu0 0.0
    %1761 = vmatpush1.xpose.msra.mxu0 0.0
    %1762 = vmatprep.subr.mxu0 0.0
    %1763 = vmatpush1.xpose.msra.mxu0 0.0
    %1764 = vmatprep.subr.mxu0 0.0
    %1765 = vmatpush1.xpose.msra.mxu0 0.0
    %1766 = vmatprep.subr.mxu0 0.0
    %1767 = vmatpush1.xpose.msra.mxu0 0.0
    %1768 = vmatprep.subr.mxu0 0.0
    %1769 = vmatpush1.xpose.msra.mxu0 0.0
    %1770 = vmatprep.subr.mxu0 0.0
    %1771 = vmatpush1.xpose.msra.mxu0 0.0
    %1772 = vmatprep.subr.mxu0 0.0
    %1773 = vmatpush1.xpose.msra.mxu0 0.0
    %1774 = vmatprep.subr.mxu0 0.0
    %1775 = vmatpush1.xpose.msra.mxu0 0.0
    %1776 = vmatprep.subr.mxu0 0.0
    %1777 = vmatpush1.xpose.msra.mxu0 0.0
    %1778 = vmatprep.subr.mxu0 0.0
    %1779 = vmatpush1.xpose.msra.mxu0 0.0
    %1780 = vmatprep.subr.mxu0 0.0
    %1781 = vmatpush1.xpose.msra.mxu0 0.0
    %1782 = vmatprep.subr.mxu0 0.0
    %1783 = vmatpush1.xpose.msra.mxu0 0.0
    %1784 = vmatprep.subr.mxu0 0.0
    %1785 = vmatpush1.xpose.msra.mxu0 0.0
    %1786 = vmatprep.subr.mxu0 0.0
    %1787 = vmatpush1.xpose.msra.mxu0 0.0
    %1788 = vmatprep.subr.mxu0 0.0
    %1789 = vmatpush1.xpose.msra.mxu0 0.0
    %1790 = vmatprep.subr.mxu0 0.0
    %1791 = vmatpush1.xpose.msra.mxu0 0.0
    %1792 = vmatprep.subr.mxu0 0.0
    %1793 = vmatpush1.xpose.msra.mxu0 0.0
    %1794 = vmatprep.subr.mxu0 0.0
    %1795 = vmatpush1.xpose.msra.mxu0 0.0
    %1796 = vmatprep.subr.mxu0 0.0
    %1797 = vmatpush1.xpose.msra.mxu0 0.0
    %1798 = vmatprep.subr.mxu0 0.0
    %1799 = vmatpush1.xpose.msra.mxu0 0.0
    %1800 = vmatprep.subr.mxu0 0.0
    %1801 = vmatpush1.xpose.msra.mxu0 0.0
    %1802 = vmatprep.subr.mxu0 0.0
    %1803 = vmatpush1.xpose.msra.mxu0 0.0
    %1804 = vmatprep.subr.mxu0 0.0
    %1805 = vmatpush1.xpose.msra.mxu0 0.0
    %1806 = vmatprep.subr.mxu0 0.0
    %1807 = vmatpush1.xpose.msra.mxu0 0.0
    %1808 = vmatprep.subr.mxu0 0.0
    %1809 = vmatpush1.xpose.msra.mxu0 0.0
    %1810 = vmatprep.subr.mxu0 0.0
    %1811 = vmatpush1.xpose.msra.mxu0 0.0
    %1812 = vmatprep.subr.mxu0 0.0
    %1813 = vmatpush1.xpose.msra.mxu0 0.0
    %1814 = vmatprep.subr.mxu0 0.0
    %1815 = vmatpush1.xpose.msra.mxu0 0.0
    %1816 = vmatprep.subr.mxu0 0.0
    %1817 = vmatpush1.xpose.msra.mxu0 0.0
    %1818 = vmatprep.mubr.f32.mxu0 0.0
    %1819 = vmatmul.mubr.f32.gmra.mrb[0].mxu0 %v1749
    %v1820 = vpop.f32.mrb[0].mxu0
    %v1821 = vadd.f32 0.0, %v1820
    %v1822 = vpop.f32.mrb[0].mxu0
    %1823 = vdwg.mxu0
    %v1825 = vsel %vm164, %v599, 0
    %v1828 = vsel %vm164, %v755, 0
    %1830 = vmatprep.subr.mxu0 0.0
    %1831 = vmatpush1.xpose.msra.mxu0 %v1828
    %1832 = vmatprep.subr.mxu0 0.0
    %1833 = vmatpush1.xpose.msra.mxu0 0.0
    %1834 = vmatprep.subr.mxu0 0.0
    %1835 = vmatpush1.xpose.msra.mxu0 0.0
    %1836 = vmatprep.subr.mxu0 0.0
    %1837 = vmatpush1.xpose.msra.mxu0 0.0
    %1838 = vmatprep.subr.mxu0 0.0
    %1839 = vmatpush1.xpose.msra.mxu0 0.0
    %1840 = vmatprep.subr.mxu0 0.0
    %1841 = vmatpush1.xpose.msra.mxu0 0.0
    %1842 = vmatprep.subr.mxu0 0.0
    %1843 = vmatpush1.xpose.msra.mxu0 0.0
    %1844 = vmatprep.subr.mxu0 0.0
    %1845 = vmatpush1.xpose.msra.mxu0 0.0
    %1846 = vmatprep.subr.mxu0 0.0
    %1847 = vmatpush1.xpose.msra.mxu0 0.0
    %1848 = vmatprep.subr.mxu0 0.0
    %1849 = vmatpush1.xpose.msra.mxu0 0.0
    %1850 = vmatprep.subr.mxu0 0.0
    %1851 = vmatpush1.xpose.msra.mxu0 0.0
    %1852 = vmatprep.subr.mxu0 0.0
    %1853 = vmatpush1.xpose.msra.mxu0 0.0
    %1854 = vmatprep.subr.mxu0 0.0
    %1855 = vmatpush1.xpose.msra.mxu0 0.0
    %1856 = vmatprep.subr.mxu0 0.0
    %1857 = vmatpush1.xpose.msra.mxu0 0.0
    %1858 = vmatprep.subr.mxu0 0.0
    %1859 = vmatpush1.xpose.msra.mxu0 0.0
    %1860 = vmatprep.subr.mxu0 0.0
    %1861 = vmatpush1.xpose.msra.mxu0 0.0
    %1862 = vmatprep.subr.mxu0 0.0
    %1863 = vmatpush1.xpose.msra.mxu0 0.0
    %1864 = vmatprep.subr.mxu0 0.0
    %1865 = vmatpush1.xpose.msra.mxu0 0.0
    %1866 = vmatprep.subr.mxu0 0.0
    %1867 = vmatpush1.xpose.msra.mxu0 0.0
    %1868 = vmatprep.subr.mxu0 0.0
    %1869 = vmatpush1.xpose.msra.mxu0 0.0
    %1870 = vmatprep.subr.mxu0 0.0
    %1871 = vmatpush1.xpose.msra.mxu0 0.0
    %1872 = vmatprep.subr.mxu0 0.0
    %1873 = vmatpush1.xpose.msra.mxu0 0.0
    %1874 = vmatprep.subr.mxu0 0.0
    %1875 = vmatpush1.xpose.msra.mxu0 0.0
    %1876 = vmatprep.subr.mxu0 0.0
    %1877 = vmatpush1.xpose.msra.mxu0 0.0
    %1878 = vmatprep.subr.mxu0 0.0
    %1879 = vmatpush1.xpose.msra.mxu0 0.0
    %1880 = vmatprep.subr.mxu0 0.0
    %1881 = vmatpush1.xpose.msra.mxu0 0.0
    %1882 = vmatprep.subr.mxu0 0.0
    %1883 = vmatpush1.xpose.msra.mxu0 0.0
    %1884 = vmatprep.subr.mxu0 0.0
    %1885 = vmatpush1.xpose.msra.mxu0 0.0
    %1886 = vmatprep.subr.mxu0 0.0
    %1887 = vmatpush1.xpose.msra.mxu0 0.0
    %1888 = vmatprep.subr.mxu0 0.0
    %1889 = vmatpush1.xpose.msra.mxu0 0.0
    %1890 = vmatprep.subr.mxu0 0.0
    %1891 = vmatpush1.xpose.msra.mxu0 0.0
    %1892 = vmatprep.subr.mxu0 0.0
    %1893 = vmatpush1.xpose.msra.mxu0 0.0
    %1894 = vmatprep.mubr.f32.mxu0 0.0
    %1895 = vmatmul.mubr.f32.gmra.mrb[0].mxu0 %v1825
    %v1896 = vpop.f32.mrb[0].mxu0
    %v1897 = vadd.f32 0.0, %v1896
    %v1898 = vpop.f32.mrb[0].mxu0
    %1899 = vdwg.mxu0
    %v1901 = vsel %vm164, %v603, 0
    %v1904 = vsel %vm164, %v759, 0
    %1906 = vmatprep.subr.mxu0 0.0
    %1907 = vmatpush1.xpose.msra.mxu0 %v1904
    %1908 = vmatprep.subr.mxu0 0.0
    %1909 = vmatpush1.xpose.msra.mxu0 0.0
    %1910 = vmatprep.subr.mxu0 0.0
    %1911 = vmatpush1.xpose.msra.mxu0 0.0
    %1912 = vmatprep.subr.mxu0 0.0
    %1913 = vmatpush1.xpose.msra.mxu0 0.0
    %1914 = vmatprep.subr.mxu0 0.0
    %1915 = vmatpush1.xpose.msra.mxu0 0.0
    %1916 = vmatprep.subr.mxu0 0.0
    %1917 = vmatpush1.xpose.msra.mxu0 0.0
    %1918 = vmatprep.subr.mxu0 0.0
    %1919 = vmatpush1.xpose.msra.mxu0 0.0
    %1920 = vmatprep.subr.mxu0 0.0
    %1921 = vmatpush1.xpose.msra.mxu0 0.0
    %1922 = vmatprep.subr.mxu0 0.0
    %1923 = vmatpush1.xpose.msra.mxu0 0.0
    %1924 = vmatprep.subr.mxu0 0.0
    %1925 = vmatpush1.xpose.msra.mxu0 0.0
    %1926 = vmatprep.subr.mxu0 0.0
    %1927 = vmatpush1.xpose.msra.mxu0 0.0
    %1928 = vmatprep.subr.mxu0 0.0
    %1929 = vmatpush1.xpose.msra.mxu0 0.0
    %1930 = vmatprep.subr.mxu0 0.0
    %1931 = vmatpush1.xpose.msra.mxu0 0.0
    %1932 = vmatprep.subr.mxu0 0.0
    %1933 = vmatpush1.xpose.msra.mxu0 0.0
    %1934 = vmatprep.subr.mxu0 0.0
    %1935 = vmatpush1.xpose.msra.mxu0 0.0
    %1936 = vmatprep.subr.mxu0 0.0
    %1937 = vmatpush1.xpose.msra.mxu0 0.0
    %1938 = vmatprep.subr.mxu0 0.0
    %1939 = vmatpush1.xpose.msra.mxu0 0.0
    %1940 = vmatprep.subr.mxu0 0.0
    %1941 = vmatpush1.xpose.msra.mxu0 0.0
    %1942 = vmatprep.subr.mxu0 0.0
    %1943 = vmatpush1.xpose.msra.mxu0 0.0
    %1944 = vmatprep.subr.mxu0 0.0
    %1945 = vmatpush1.xpose.msra.mxu0 0.0
    %1946 = vmatprep.subr.mxu0 0.0
    %1947 = vmatpush1.xpose.msra.mxu0 0.0
    %1948 = vmatprep.subr.mxu0 0.0
    %1949 = vmatpush1.xpose.msra.mxu0 0.0
    %1950 = vmatprep.subr.mxu0 0.0
    %1951 = vmatpush1.xpose.msra.mxu0 0.0
    %1952 = vmatprep.subr.mxu0 0.0
    %1953 = vmatpush1.xpose.msra.mxu0 0.0
    %1954 = vmatprep.subr.mxu0 0.0
    %1955 = vmatpush1.xpose.msra.mxu0 0.0
    %1956 = vmatprep.subr.mxu0 0.0
    %1957 = vmatpush1.xpose.msra.mxu0 0.0
    %1958 = vmatprep.subr.mxu0 0.0
    %1959 = vmatpush1.xpose.msra.mxu0 0.0
    %1960 = vmatprep.subr.mxu0 0.0
    %1961 = vmatpush1.xpose.msra.mxu0 0.0
    %1962 = vmatprep.subr.mxu0 0.0
    %1963 = vmatpush1.xpose.msra.mxu0 0.0
    %1964 = vmatprep.subr.mxu0 0.0
    %1965 = vmatpush1.xpose.msra.mxu0 0.0
    %1966 = vmatprep.subr.mxu0 0.0
    %1967 = vmatpush1.xpose.msra.mxu0 0.0
    %1968 = vmatprep.subr.mxu0 0.0
    %1969 = vmatpush1.xpose.msra.mxu0 0.0
    %1970 = vmatprep.mubr.f32.mxu0 0.0
    %1971 = vmatmul.mubr.f32.gmra.mrb[0].mxu0 %v1901
    %v1972 = vpop.f32.mrb[0].mxu0
    %v1973 = vadd.f32 0.0, %v1972
    %v1974 = vpop.f32.mrb[0].mxu0
    %1975 = vdwg.mxu0
    %v1976 = vcombine.low %v833, %v985
    %v1978 = vunpack.c.l.s4 1983009808
    %v1979 = vunpack.c.0.s8 %v1978
    %v1980 = vlaneseq
    %v1981 = vshrl.u32 %v1980, 7
    %v1982 = vsub.s32 %v1979, %v1981
    %v1983 = vrot.slane %v1976, %v1982
    %v1984 = vcombine.low %v909, %v1061
    %v1986 = vunpack.c.l.s4 1983009808
    %v1987 = vunpack.c.0.s8 %v1986
    %v1988 = vlaneseq
    %v1989 = vshrl.u32 %v1988, 7
    %v1990 = vsub.s32 %v1987, %v1989
    %v1991 = vrot.slane %v1984, %v1990
    %v1992 = vcombine.low %v1137, %v1289
    %v1994 = vunpack.c.l.s4 1983009808
    %v1995 = vunpack.c.0.s8 %v1994
    %v1996 = vlaneseq
    %v1997 = vshrl.u32 %v1996, 7
    %v1998 = vsub.s32 %v1995, %v1997
    %v1999 = vrot.slane %v1992, %v1998
    %v2000 = vcombine.low %v1213, %v1365
    %v2002 = vunpack.c.l.s4 1983009808
    %v2003 = vunpack.c.0.s8 %v2002
    %v2004 = vlaneseq
    %v2005 = vshrl.u32 %v2004, 7
    %v2006 = vsub.s32 %v2003, %v2005
    %v2007 = vrot.slane %v2000, %v2006
    %v2008 = vcombine.low %v1983, %v1991
    %v2009 = vcombine.high %v1983, %v1991
    %v2011 = vunpack.c.l.s4 1934713408
    %v2012 = vunpack.c.0.s8 %v2011
    %v2013 = vlaneseq
    %v2014 = vshrl.u32 %v2013, 7
    %v2015 = vsub.s32 %v2012, %v2014
    %v2016 = vrot.slane %v2008, %v2015
    %v2018 = vunpack.c.l.s4 1934713408
    %v2019 = vunpack.c.0.s8 %v2018
    %v2020 = vlaneseq
    %v2021 = vshrl.u32 %v2020, 7
    %v2022 = vsub.s32 %v2019, %v2021
    %v2023 = vrot.slane %v2009, %v2022
    %v2024 = vcombine.low %v1999, %v2007
    %v2025 = vcombine.high %v1999, %v2007
    %v2027 = vunpack.c.l.s4 1934713408
    %v2028 = vunpack.c.0.s8 %v2027
    %v2029 = vlaneseq
    %v2030 = vshrl.u32 %v2029, 7
    %v2031 = vsub.s32 %v2028, %v2030
    %v2032 = vrot.slane %v2024, %v2031
    %v2034 = vunpack.c.l.s4 1934713408
    %v2035 = vunpack.c.0.s8 %v2034
    %v2036 = vlaneseq
    %v2037 = vshrl.u32 %v2036, 7
    %v2038 = vsub.s32 %v2035, %v2037
    %v2039 = vrot.slane %v2025, %v2038
    %v2040 = vcombine.low %v2016, %v2032
    %v2041 = vcombine.high %v2016, %v2032
    %v2042 = vcombine.low %v2023, %v2039
    %v2043 = vcombine.high %v2023, %v2039
    %v2044 = vcombine.low %v1441, %v1593
    %v2046 = vunpack.c.l.s4 1983009808
    %v2047 = vunpack.c.0.s8 %v2046
    %v2048 = vlaneseq
    %v2049 = vshrl.u32 %v2048, 7
    %v2050 = vsub.s32 %v2047, %v2049
    %v2051 = vrot.slane %v2044, %v2050
    %v2052 = vcombine.low %v1517, %v1669
    %v2054 = vunpack.c.l.s4 1983009808
    %v2055 = vunpack.c.0.s8 %v2054
    %v2056 = vlaneseq
    %v2057 = vshrl.u32 %v2056, 7
    %v2058 = vsub.s32 %v2055, %v2057
    %v2059 = vrot.slane %v2052, %v2058
    %v2060 = vcombine.low %v1745, %v1897
    %v2062 = vunpack.c.l.s4 1983009808
    %v2063 = vunpack.c.0.s8 %v2062
    %v2064 = vlaneseq
    %v2065 = vshrl.u32 %v2064, 7
    %v2066 = vsub.s32 %v2063, %v2065
    %v2067 = vrot.slane %v2060, %v2066
    %v2068 = vcombine.low %v1821, %v1973
    %v2070 = vunpack.c.l.s4 1983009808
    %v2071 = vunpack.c.0.s8 %v2070
    %v2072 = vlaneseq
    %v2073 = vshrl.u32 %v2072, 7
    %v2074 = vsub.s32 %v2071, %v2073
    %v2075 = vrot.slane %v2068, %v2074
    %v2076 = vcombine.low %v2051, %v2059
    %v2077 = vcombine.high %v2051, %v2059
    %v2079 = vunpack.c.l.s4 1934713408
    %v2080 = vunpack.c.0.s8 %v2079
    %v2081 = vlaneseq
    %v2082 = vshrl.u32 %v2081, 7
    %v2083 = vsub.s32 %v2080, %v2082
    %v2084 = vrot.slane %v2076, %v2083
    %v2086 = vunpack.c.l.s4 1934713408
    %v2087 = vunpack.c.0.s8 %v2086
    %v2088 = vlaneseq
    %v2089 = vshrl.u32 %v2088, 7
    %v2090 = vsub.s32 %v2087, %v2089
    %v2091 = vrot.slane %v2077, %v2090
    %v2092 = vcombine.low %v2067, %v2075
    %v2093 = vcombine.high %v2067, %v2075
    %v2095 = vunpack.c.l.s4 1934713408
    %v2096 = vunpack.c.0.s8 %v2095
    %v2097 = vlaneseq
    %v2098 = vshrl.u32 %v2097, 7
    %v2099 = vsub.s32 %v2096, %v2098
    %v2100 = vrot.slane %v2092, %v2099
    %v2102 = vunpack.c.l.s4 1934713408
    %v2103 = vunpack.c.0.s8 %v2102
    %v2104 = vlaneseq
    %v2105 = vshrl.u32 %v2104, 7
    %v2106 = vsub.s32 %v2103, %v2105
    %v2107 = vrot.slane %v2093, %v2106
    %v2108 = vcombine.low %v2084, %v2100
    %v2109 = vcombine.high %v2084, %v2100
    %v2110 = vcombine.low %v2091, %v2107
    %v2111 = vcombine.high %v2091, %v2107
    %2114 = vrot.lane.b32.xlu0 %v2041, 4
    %v2115 = vpop.permute.xlu0 %2114
    %2116 = vrot.lane.b32.xlu0 %v2109, 4
    %v2117 = vpop.permute.xlu0 %2116
    %2122 = vrot.lane.b32.xlu0 %v2042, 8
    %v2123 = vpop.permute.xlu0 %2122
    %2124 = vrot.lane.b32.xlu0 %v2110, 8
    %v2125 = vpop.permute.xlu0 %2124
    %2130 = vrot.lane.b32.xlu0 %v2043, 12
    %v2131 = vpop.permute.xlu0 %2130
    %2132 = vrot.lane.b32.xlu0 %v2111, 12
    %v2133 = vpop.permute.xlu0 %2132
    %vm2136 = vcmask 31744
    %v2137 = vsel %vm2136, %v2040, %v2115
    %v2138 = vsel %vm2136, %v2108, %v2117
    %v2139 = vsel %vm164, %v2137, %v2123
    %v2140 = vsel %vm164, %v2138, %v2125
    %vm2141 = vcmask 97280
    %v2142 = vsel %vm2141, %v2139, %v2131
    %v2143 = vsel %vm2141, %v2140, %v2133
    %vm2144 = vcmask 130048
    %2145 = vst.msk [vmem:[#allocation8] sm:$0xff] %vm2144, %v2142
    %2146 = vst.msk [vmem:[#allocation8 + $0x8] sm:$0xff] %vm2144, %v2143
    // Predicated region
    $region50: #{tpu_custom_call.1} parent=1 // pred_check
      _
    $region51: #{tpu_custom_call.1} parent=1 // pred_check_branch
      %2148 = sbr.rel (0) target = $region53
    $region52: #{tpu_custom_call.1} parent=1 // pred_region
      %s2150 = ssub.s32 256, 256
      %2151 = vsyncadd [#allocation4], %s2150
      %s2152 = sshll.u32 [#allocation8], 4
      %s2153 = int_to_ptr.vmem [resolvable:$true] %s2152
      %2158 = dma.vmem_to_hbm [thread:$0]  %s2153, 256, %s9, [#allocation4], 128, 128, 8
    $region53: #{tpu_custom_call.1} parent=1 // pred_fallthru
      _
    // Predicated region
    $region54: #{tpu_custom_call.1} parent=1 // pred_check
      _
    $region55: #{tpu_custom_call.1} parent=1 // pred_check_branch
      %2160 = sbr.rel (0) target = $region57
    $region56: #{tpu_custom_call.1} parent=1 // pred_region
      %2161 = dma.done [#allocation4], 256
    $region57: #{tpu_custom_call.1} parent=1 // pred_fallthru
      _
    %2162 = vsyncpa [#allocation3], 1
    %2163 = vsyncpa [#allocation6], 1
    %2164 = vsyncpa [#allocation4], 1

</llo_original>
